<compile_context>
chip_gen: v7x
topology: tpu7x:2x2x1
jax: 0.10.0
libtpu: 0.0.40
codegen_flags: <defaults>
</compile_context>

<pallas_src>
import functools

import jax
import jax.numpy as jnp
from jax.experimental import pallas as pl
from jax.experimental.pallas import tpu as pltpu


# -----------------------------------------------------------------------------
# Shared in-kernel LSTM recurrence (whole sequence, no grid)
# -----------------------------------------------------------------------------
def _lstm_recurrence(x_ref, wih_ref, whh_ref, b_ref, xg_ref, hidden):
    """x_ref: (T, M, Din) time-major in VMEM. Returns final hidden state (M, H) f32.

    Weights are pre-reordered to gate order [i, f, o | g] by the wrapper.
    """
    T, M, DIN = x_ref.shape
    H = hidden
    w_hh = whh_ref[...]                                   # (H, 4H)

    # Time-parallel input projection: one big MXU matmul over all steps.
    x2d = x_ref[...].astype(jnp.float32).reshape(T * M, DIN)
    xg = jnp.dot(x2d, wih_ref[...], preferred_element_type=jnp.float32) + b_ref[...]
    xg_ref[...] = xg.reshape(T, M, 4 * H)                 # stash in VMEM scratch

    h0 = jnp.zeros((M, H), jnp.float32)
    c0 = jnp.zeros((M, H), jnp.float32)

    def step(t, carry):
        h, c = carry
        # One MXU push per recurrent step.
        gates = xg_ref[t] + jnp.dot(h, w_hh, preferred_element_type=jnp.float32)
        sig = jax.nn.sigmoid(gates[:, : 3 * H])           # [i | f | o] in one EUP pass
        g = jnp.tanh(gates[:, 3 * H:])
        c_new = sig[:, H:2 * H] * c + sig[:, :H] * g
        h_new = sig[:, 2 * H:] * jnp.tanh(c_new)
        return (h_new, c_new)

    h, _ = jax.lax.fori_loop(0, T, step, (h0, c0), unroll=True)
    return h


# -----------------------------------------------------------------------------
# In-kernel Barlow-Twins loss
# -----------------------------------------------------------------------------
def _barlow_twins_loss(z1, z2, alpha):
    n = z1.shape[0]
    d = z1.shape[1]

    def normalize(z):
        mean = jnp.mean(z, axis=0, keepdims=True)
        cen = z - mean
        # torch.std default: unbiased (ddof=1)
        var = jnp.sum(cen * cen, axis=0, keepdims=True) / float(max(n - 1, 1))
        return cen / (jnp.sqrt(var) + alpha)

    z_a = normalize(z1)
    z_b = normalize(z2)

    # Contract the batch axis directly on the MXU (no explicit transpose).
    c = jax.lax.dot_general(
        z_a, z_b,
        dimension_numbers=(((0,), (0,)), ((), ())),
        preferred_element_type=jnp.float32,
    ) / float(n)                                          # (D, D)

    row = jax.lax.broadcasted_iota(jnp.int32, (d, d), 0)
    col = jax.lax.broadcasted_iota(jnp.int32, (d, d), 1)
    eye = (row == col).astype(jnp.float32)

    diff = c - eye
    sq = diff * diff
    # diag weight 1.0, off-diag weight 0.002:
    #   loss = 0.002 * sum(sq) + (1 - 0.002) * sum(diag(sq))
    return 0.002 * jnp.sum(sq) + 0.998 * jnp.sum(eye * sq)


# -----------------------------------------------------------------------------
# Kernels
# -----------------------------------------------------------------------------
def fused_loss_kernel(x_ref, wih_ref, whh_ref, b_ref, loss_ref, xg_ref,
                      *, n_per_view, hidden, alpha):
    """Both views' LSTM embeddings + Barlow-Twins loss in one kernel."""
    h_all = _lstm_recurrence(x_ref, wih_ref, whh_ref, b_ref, xg_ref, hidden)
    z1 = h_all[:n_per_view]
    z2 = h_all[n_per_view:]
    loss_ref[0] = _barlow_twins_loss(z1, z2, alpha)


def embed_kernel(x_ref, wih_ref, whh_ref, b_ref, h_out_ref, xg_ref, *, hidden):
    """Single-view embedding (return_feat=True path)."""
    h = _lstm_recurrence(x_ref, wih_ref, whh_ref, b_ref, xg_ref, hidden)
    h_out_ref[...] = h.astype(h_out_ref.dtype)


# -----------------------------------------------------------------------------
# Wrappers
# -----------------------------------------------------------------------------
def _reorder_gate_cols(w):
    """PyTorch LSTM gate order (i, f, g, o) -> (i, f, o, g): sigmoid gates contiguous."""
    h = w.shape[-1] // 4
    return jnp.concatenate(
        [w[..., : 2 * h], w[..., 3 * h:], w[..., 2 * h: 3 * h]], axis=-1)


def slow_learner_market_forward(inputs, params, *, alpha,
                                loss_type="BarlowTwins", return_feat=False):
    """inputs: (x1, x2) each (N, T, Din) when computing the loss,
               or a single (N, T, Din) tensor when return_feat=True.
       params: (w_ih (Din,4H), w_hh (H,4H), b (1,4H)) in PyTorch gate order."""
    w_ih, w_hh, b = params
    w_ih = _reorder_gate_cols(w_ih)
    w_hh = _reorder_gate_cols(w_hh)
    b = _reorder_gate_cols(b)
    H = w_hh.shape[0]

    vmem_spec = pl.BlockSpec(memory_space=pltpu.MemorySpace.VMEM)

    if return_feat:
        x = inputs                                   # single tensor (N, T, Din)
        N, T, DIN = x.shape
        x_tmd = jnp.transpose(x, (1, 0, 2))          # time-major (T, N, Din)
        return pl.pallas_call(
            functools.partial(embed_kernel, hidden=H),
            out_shape=jax.ShapeDtypeStruct((N, H), jnp.float32),
            in_specs=[vmem_spec] * 4,
            out_specs=pl.BlockSpec(memory_space=pltpu.MemorySpace.VMEM),
            scratch_shapes=[pltpu.VMEM((T, N, 4 * H), jnp.float32)],
        )(x_tmd, w_ih, w_hh, b)

    if loss_type != "BarlowTwins":
        raise NotImplementedError(loss_type)

    x1, x2 = inputs
    N, T, DIN = x1.shape
    x_cat = jnp.concatenate([x1, x2], axis=0)        # (2N, T, Din): both views fused
    x_tmd = jnp.transpose(x_cat, (1, 0, 2))          # time-major (T, 2N, Din)

    loss = pl.pallas_call(
        functools.partial(fused_loss_kernel, n_per_view=N, hidden=H, alpha=alpha),
        out_shape=jax.ShapeDtypeStruct((1,), jnp.float32),
        in_specs=[vmem_spec] * 4,
        out_specs=pl.BlockSpec(memory_space=pltpu.MemorySpace.SMEM),
        scratch_shapes=[pltpu.VMEM((T, 2 * N, 4 * H), jnp.float32)],
    )(x_tmd, w_ih, w_hh, b)
    return loss[0]


if __name__ == "__main__":
    key = jax.random.PRNGKey(0)
    N, T, DIN, H = 8, 8, 16, 32     # batch, seq len, input feat, hidden/emb dim
    k1, k2, k3, k4, k5 = jax.random.split(key, 5)

    # two "views" of the sequence input
    x1 = jax.random.normal(k1, (N, T, DIN), dtype=jnp.float32)
    x2 = jax.random.normal(k2, (N, T, DIN), dtype=jnp.float32)

    # deterministic LSTM parameters (PyTorch-style uniform(-1/sqrt(H), 1/sqrt(H)))
    scale = float(1.0 / (H ** 0.5))
    w_ih = jax.random.uniform(k3, (DIN, 4 * H), jnp.float32, -scale, scale)
    w_hh = jax.random.uniform(k4, (H, 4 * H), jnp.float32, -scale, scale)
    b = jax.random.uniform(k5, (1, 4 * H), jnp.float32, -scale, scale)

    alpha = 1e-3  # args.alpha

    # Loss path (fused: both LSTM passes + Barlow-Twins in one pallas_call).
    loss = slow_learner_market_forward((x1, x2), (w_ih, w_hh, b), alpha=alpha)
    loss = jax.block_until_ready(loss)
    assert loss.shape == () and bool(jnp.isfinite(loss))

    # return_feat path (single view -> embedding).
    feat = slow_learner_market_forward(x1, (w_ih, w_hh, b), alpha=alpha,
                                       return_feat=True)
    feat = jax.block_until_ready(feat)
    assert feat.shape == (N, H) and bool(jnp.all(jnp.isfinite(feat)))

    print("KERNEL_OK")
</pallas_src>

<mosaic_0001>
module attributes {stable_mosaic.version = 11 : i64} {
  func.func @fused_loss_kernel(%arg0: memref<8x16x16xf32, #tpu.memory_space<vmem>>, %arg1: memref<16x128xf32, #tpu.memory_space<vmem>>, %arg2: memref<32x128xf32, #tpu.memory_space<vmem>>, %arg3: memref<1x128xf32, #tpu.memory_space<vmem>>, %arg4: memref<1xf32, #tpu.memory_space<smem>>, %arg5: memref<8x16x128xf32, #tpu.memory_space<vmem>>) attributes {dimension_semantics = [], scalar_prefetch = 0 : i64, scratch_operands = 1 : i64, tpu.core_type = #tpu.core_type<tc>} {
    %c0 = arith.constant 0 : index
    %c0_0 = arith.constant 0 : index
    %0 = vector.load %arg2[%c0, %c0_0] : memref<32x128xf32, #tpu.memory_space<vmem>>, vector<32x128xf32>
    %c0_1 = arith.constant 0 : index
    %c0_2 = arith.constant 0 : index
    %c0_3 = arith.constant 0 : index
    %1 = vector.load %arg0[%c0_1, %c0_2, %c0_3] : memref<8x16x16xf32, #tpu.memory_space<vmem>>, vector<8x16x16xf32>
    %2 = vector.shape_cast %1 : vector<8x16x16xf32> to vector<128x16xf32>
    %c0_4 = arith.constant 0 : index
    %c0_5 = arith.constant 0 : index
    %3 = vector.load %arg1[%c0_4, %c0_5] : memref<16x128xf32, #tpu.memory_space<vmem>>, vector<16x128xf32>
    %cst = arith.constant dense<0.000000e+00> : vector<128x128xf32>
    %4 = tpu.matmul %2, %3, %cst {dimension_numbers = #tpu.dot_dimension_numbers<[1], [0], [0], [1], [0, 0, 1, 1], [], []>} : vector<128x16xf32>, vector<16x128xf32>, vector<128x128xf32> -> vector<128x128xf32>
    %c0_6 = arith.constant 0 : index
    %c0_7 = arith.constant 0 : index
    %5 = vector.load %arg3[%c0_6, %c0_7] : memref<1x128xf32, #tpu.memory_space<vmem>>, vector<1x128xf32>
    %6 = vector.broadcast %5 : vector<1x128xf32> to vector<128x128xf32>
    %7 = arith.addf %4, %6 : vector<128x128xf32>
    %8 = vector.shape_cast %7 : vector<128x128xf32> to vector<8x16x128xf32>
    %c0_8 = arith.constant 0 : index
    %c0_9 = arith.constant 0 : index
    %c0_10 = arith.constant 0 : index
    %9 = vector.load %arg5[%c0_8, %c0_9, %c0_10] : memref<8x16x128xf32, #tpu.memory_space<vmem>>, vector<8x16x128xf32>
    tpu.vector_store %arg5[%c0_8, %c0_9, %c0_10], %8 {strides = array<i32>} : memref<8x16x128xf32, #tpu.memory_space<vmem>>, vector<8x16x128xf32>,
    %cst_11 = arith.constant 0.000000e+00 : f32
    %10 = vector.broadcast %cst_11 : f32 to vector<16x32xf32>
    %cst_12 = arith.constant 0.000000e+00 : f32
    %11 = vector.broadcast %cst_12 : f32 to vector<16x32xf32>
    %c0_i32 = arith.constant 0 : i32
    %12 = arith.index_cast %c0_i32 : i32 to index
    %c0_13 = arith.constant 0 : index
    %c0_14 = arith.constant 0 : index
    %13 = vector.load %arg5[%12, %c0_13, %c0_14] : memref<8x16x128xf32, #tpu.memory_space<vmem>>, vector<1x16x128xf32>
    %14 = vector.shape_cast %13 : vector<1x16x128xf32> to vector<16x128xf32>
    %cst_15 = arith.constant dense<0.000000e+00> : vector<16x128xf32>
    %15 = tpu.matmul %10, %0, %cst_15 {dimension_numbers = #tpu.dot_dimension_numbers<[1], [0], [0], [1], [0, 0, 1, 1], [], []>} : vector<16x32xf32>, vector<32x128xf32>, vector<16x128xf32> -> vector<16x128xf32>
    %16 = arith.addf %14, %15 : vector<16x128xf32>
    %17 = vector.extract_strided_slice %16 {offsets = [0, 0], sizes = [16, 96], strides = [1, 1]} : vector<16x128xf32> to vector<16x96xf32>
    %18 = arith.negf %17 : vector<16x96xf32>
    %19 = math.exp %18 : vector<16x96xf32>
    %cst_16 = arith.constant 1.000000e+00 : f32
    %20 = vector.broadcast %cst_16 : f32 to vector<16x96xf32>
    %21 = arith.addf %20, %19 : vector<16x96xf32>
    %22 = arith.divf %20, %21 : vector<16x96xf32>
    %23 = vector.extract_strided_slice %16 {offsets = [0, 96], sizes = [16, 32], strides = [1, 1]} : vector<16x128xf32> to vector<16x32xf32>
    %24 = math.tanh %23 : vector<16x32xf32>
    %25 = vector.extract_strided_slice %22 {offsets = [0, 32], sizes = [16, 32], strides = [1, 1]} : vector<16x96xf32> to vector<16x32xf32>
    %26 = arith.mulf %25, %11 : vector<16x32xf32>
    %27 = vector.extract_strided_slice %22 {offsets = [0, 0], sizes = [16, 32], strides = [1, 1]} : vector<16x96xf32> to vector<16x32xf32>
    %28 = arith.mulf %27, %24 : vector<16x32xf32>
    %29 = arith.addf %26, %28 : vector<16x32xf32>
    %30 = vector.extract_strided_slice %22 {offsets = [0, 64], sizes = [16, 32], strides = [1, 1]} : vector<16x96xf32> to vector<16x32xf32>
    %31 = math.tanh %29 : vector<16x32xf32>
    %32 = arith.mulf %30, %31 : vector<16x32xf32>
    %c1_i32 = arith.constant 1 : i32
    %33 = arith.index_cast %c1_i32 : i32 to index
    %c0_17 = arith.constant 0 : index
    %c0_18 = arith.constant 0 : index
    %34 = vector.load %arg5[%33, %c0_17, %c0_18] : memref<8x16x128xf32, #tpu.memory_space<vmem>>, vector<1x16x128xf32>
    %35 = vector.shape_cast %34 : vector<1x16x128xf32> to vector<16x128xf32>
    %cst_19 = arith.constant dense<0.000000e+00> : vector<16x128xf32>
    %36 = tpu.matmul %32, %0, %cst_19 {dimension_numbers = #tpu.dot_dimension_numbers<[1], [0], [0], [1], [0, 0, 1, 1], [], []>} : vector<16x32xf32>, vector<32x128xf32>, vector<16x128xf32> -> vector<16x128xf32>
    %37 = arith.addf %35, %36 : vector<16x128xf32>
    %38 = vector.extract_strided_slice %37 {offsets = [0, 0], sizes = [16, 96], strides = [1, 1]} : vector<16x128xf32> to vector<16x96xf32>
    %39 = arith.negf %38 : vector<16x96xf32>
    %40 = math.exp %39 : vector<16x96xf32>
    %cst_20 = arith.constant 1.000000e+00 : f32
    %41 = vector.broadcast %cst_20 : f32 to vector<16x96xf32>
    %42 = arith.addf %41, %40 : vector<16x96xf32>
    %43 = arith.divf %41, %42 : vector<16x96xf32>
    %44 = vector.extract_strided_slice %37 {offsets = [0, 96], sizes = [16, 32], strides = [1, 1]} : vector<16x128xf32> to vector<16x32xf32>
    %45 = math.tanh %44 : vector<16x32xf32>
    %46 = vector.extract_strided_slice %43 {offsets = [0, 32], sizes = [16, 32], strides = [1, 1]} : vector<16x96xf32> to vector<16x32xf32>
    %47 = arith.mulf %46, %29 : vector<16x32xf32>
    %48 = vector.extract_strided_slice %43 {offsets = [0, 0], sizes = [16, 32], strides = [1, 1]} : vector<16x96xf32> to vector<16x32xf32>
    %49 = arith.mulf %48, %45 : vector<16x32xf32>
    %50 = arith.addf %47, %49 : vector<16x32xf32>
    %51 = vector.extract_strided_slice %43 {offsets = [0, 64], sizes = [16, 32], strides = [1, 1]} : vector<16x96xf32> to vector<16x32xf32>
    %52 = math.tanh %50 : vector<16x32xf32>
    %53 = arith.mulf %51, %52 : vector<16x32xf32>
    %c2_i32 = arith.constant 2 : i32
    %54 = arith.index_cast %c2_i32 : i32 to index
    %c0_21 = arith.constant 0 : index
    %c0_22 = arith.constant 0 : index
    %55 = vector.load %arg5[%54, %c0_21, %c0_22] : memref<8x16x128xf32, #tpu.memory_space<vmem>>, vector<1x16x128xf32>
    %56 = vector.shape_cast %55 : vector<1x16x128xf32> to vector<16x128xf32>
    %cst_23 = arith.constant dense<0.000000e+00> : vector<16x128xf32>
    %57 = tpu.matmul %53, %0, %cst_23 {dimension_numbers = #tpu.dot_dimension_numbers<[1], [0], [0], [1], [0, 0, 1, 1], [], []>} : vector<16x32xf32>, vector<32x128xf32>, vector<16x128xf32> -> vector<16x128xf32>
    %58 = arith.addf %56, %57 : vector<16x128xf32>
    %59 = vector.extract_strided_slice %58 {offsets = [0, 0], sizes = [16, 96], strides = [1, 1]} : vector<16x128xf32> to vector<16x96xf32>
    %60 = arith.negf %59 : vector<16x96xf32>
    %61 = math.exp %60 : vector<16x96xf32>
    %cst_24 = arith.constant 1.000000e+00 : f32
    %62 = vector.broadcast %cst_24 : f32 to vector<16x96xf32>
    %63 = arith.addf %62, %61 : vector<16x96xf32>
    %64 = arith.divf %62, %63 : vector<16x96xf32>
    %65 = vector.extract_strided_slice %58 {offsets = [0, 96], sizes = [16, 32], strides = [1, 1]} : vector<16x128xf32> to vector<16x32xf32>
    %66 = math.tanh %65 : vector<16x32xf32>
    %67 = vector.extract_strided_slice %64 {offsets = [0, 32], sizes = [16, 32], strides = [1, 1]} : vector<16x96xf32> to vector<16x32xf32>
    %68 = arith.mulf %67, %50 : vector<16x32xf32>
    %69 = vector.extract_strided_slice %64 {offsets = [0, 0], sizes = [16, 32], strides = [1, 1]} : vector<16x96xf32> to vector<16x32xf32>
    %70 = arith.mulf %69, %66 : vector<16x32xf32>
    %71 = arith.addf %68, %70 : vector<16x32xf32>
    %72 = vector.extract_strided_slice %64 {offsets = [0, 64], sizes = [16, 32], strides = [1, 1]} : vector<16x96xf32> to vector<16x32xf32>
    %73 = math.tanh %71 : vector<16x32xf32>
    %74 = arith.mulf %72, %73 : vector<16x32xf32>
    %c3_i32 = arith.constant 3 : i32
    %75 = arith.index_cast %c3_i32 : i32 to index
    %c0_25 = arith.constant 0 : index
    %c0_26 = arith.constant 0 : index
    %76 = vector.load %arg5[%75, %c0_25, %c0_26] : memref<8x16x128xf32, #tpu.memory_space<vmem>>, vector<1x16x128xf32>
    %77 = vector.shape_cast %76 : vector<1x16x128xf32> to vector<16x128xf32>
    %cst_27 = arith.constant dense<0.000000e+00> : vector<16x128xf32>
    %78 = tpu.matmul %74, %0, %cst_27 {dimension_numbers = #tpu.dot_dimension_numbers<[1], [0], [0], [1], [0, 0, 1, 1], [], []>} : vector<16x32xf32>, vector<32x128xf32>, vector<16x128xf32> -> vector<16x128xf32>
    %79 = arith.addf %77, %78 : vector<16x128xf32>
    %80 = vector.extract_strided_slice %79 {offsets = [0, 0], sizes = [16, 96], strides = [1, 1]} : vector<16x128xf32> to vector<16x96xf32>
    %81 = arith.negf %80 : vector<16x96xf32>
    %82 = math.exp %81 : vector<16x96xf32>
    %cst_28 = arith.constant 1.000000e+00 : f32
    %83 = vector.broadcast %cst_28 : f32 to vector<16x96xf32>
    %84 = arith.addf %83, %82 : vector<16x96xf32>
    %85 = arith.divf %83, %84 : vector<16x96xf32>
    %86 = vector.extract_strided_slice %79 {offsets = [0, 96], sizes = [16, 32], strides = [1, 1]} : vector<16x128xf32> to vector<16x32xf32>
    %87 = math.tanh %86 : vector<16x32xf32>
    %88 = vector.extract_strided_slice %85 {offsets = [0, 32], sizes = [16, 32], strides = [1, 1]} : vector<16x96xf32> to vector<16x32xf32>
    %89 = arith.mulf %88, %71 : vector<16x32xf32>
    %90 = vector.extract_strided_slice %85 {offsets = [0, 0], sizes = [16, 32], strides = [1, 1]} : vector<16x96xf32> to vector<16x32xf32>
    %91 = arith.mulf %90, %87 : vector<16x32xf32>
    %92 = arith.addf %89, %91 : vector<16x32xf32>
    %93 = vector.extract_strided_slice %85 {offsets = [0, 64], sizes = [16, 32], strides = [1, 1]} : vector<16x96xf32> to vector<16x32xf32>
    %94 = math.tanh %92 : vector<16x32xf32>
    %95 = arith.mulf %93, %94 : vector<16x32xf32>
    %c4_i32 = arith.constant 4 : i32
    %96 = arith.index_cast %c4_i32 : i32 to index
    %c0_29 = arith.constant 0 : index
    %c0_30 = arith.constant 0 : index
    %97 = vector.load %arg5[%96, %c0_29, %c0_30] : memref<8x16x128xf32, #tpu.memory_space<vmem>>, vector<1x16x128xf32>
    %98 = vector.shape_cast %97 : vector<1x16x128xf32> to vector<16x128xf32>
    %cst_31 = arith.constant dense<0.000000e+00> : vector<16x128xf32>
    %99 = tpu.matmul %95, %0, %cst_31 {dimension_numbers = #tpu.dot_dimension_numbers<[1], [0], [0], [1], [0, 0, 1, 1], [], []>} : vector<16x32xf32>, vector<32x128xf32>, vector<16x128xf32> -> vector<16x128xf32>
    %100 = arith.addf %98, %99 : vector<16x128xf32>
    %101 = vector.extract_strided_slice %100 {offsets = [0, 0], sizes = [16, 96], strides = [1, 1]} : vector<16x128xf32> to vector<16x96xf32>
    %102 = arith.negf %101 : vector<16x96xf32>
    %103 = math.exp %102 : vector<16x96xf32>
    %cst_32 = arith.constant 1.000000e+00 : f32
    %104 = vector.broadcast %cst_32 : f32 to vector<16x96xf32>
    %105 = arith.addf %104, %103 : vector<16x96xf32>
    %106 = arith.divf %104, %105 : vector<16x96xf32>
    %107 = vector.extract_strided_slice %100 {offsets = [0, 96], sizes = [16, 32], strides = [1, 1]} : vector<16x128xf32> to vector<16x32xf32>
    %108 = math.tanh %107 : vector<16x32xf32>
    %109 = vector.extract_strided_slice %106 {offsets = [0, 32], sizes = [16, 32], strides = [1, 1]} : vector<16x96xf32> to vector<16x32xf32>
    %110 = arith.mulf %109, %92 : vector<16x32xf32>
    %111 = vector.extract_strided_slice %106 {offsets = [0, 0], sizes = [16, 32], strides = [1, 1]} : vector<16x96xf32> to vector<16x32xf32>
    %112 = arith.mulf %111, %108 : vector<16x32xf32>
    %113 = arith.addf %110, %112 : vector<16x32xf32>
    %114 = vector.extract_strided_slice %106 {offsets = [0, 64], sizes = [16, 32], strides = [1, 1]} : vector<16x96xf32> to vector<16x32xf32>
    %115 = math.tanh %113 : vector<16x32xf32>
    %116 = arith.mulf %114, %115 : vector<16x32xf32>
    %c5_i32 = arith.constant 5 : i32
    %117 = arith.index_cast %c5_i32 : i32 to index
    %c0_33 = arith.constant 0 : index
    %c0_34 = arith.constant 0 : index
    %118 = vector.load %arg5[%117, %c0_33, %c0_34] : memref<8x16x128xf32, #tpu.memory_space<vmem>>, vector<1x16x128xf32>
    %119 = vector.shape_cast %118 : vector<1x16x128xf32> to vector<16x128xf32>
    %cst_35 = arith.constant dense<0.000000e+00> : vector<16x128xf32>
    %120 = tpu.matmul %116, %0, %cst_35 {dimension_numbers = #tpu.dot_dimension_numbers<[1], [0], [0], [1], [0, 0, 1, 1], [], []>} : vector<16x32xf32>, vector<32x128xf32>, vector<16x128xf32> -> vector<16x128xf32>
    %121 = arith.addf %119, %120 : vector<16x128xf32>
    %122 = vector.extract_strided_slice %121 {offsets = [0, 0], sizes = [16, 96], strides = [1, 1]} : vector<16x128xf32> to vector<16x96xf32>
    %123 = arith.negf %122 : vector<16x96xf32>
    %124 = math.exp %123 : vector<16x96xf32>
    %cst_36 = arith.constant 1.000000e+00 : f32
    %125 = vector.broadcast %cst_36 : f32 to vector<16x96xf32>
    %126 = arith.addf %125, %124 : vector<16x96xf32>
    %127 = arith.divf %125, %126 : vector<16x96xf32>
    %128 = vector.extract_strided_slice %121 {offsets = [0, 96], sizes = [16, 32], strides = [1, 1]} : vector<16x128xf32> to vector<16x32xf32>
    %129 = math.tanh %128 : vector<16x32xf32>
    %130 = vector.extract_strided_slice %127 {offsets = [0, 32], sizes = [16, 32], strides = [1, 1]} : vector<16x96xf32> to vector<16x32xf32>
    %131 = arith.mulf %130, %113 : vector<16x32xf32>
    %132 = vector.extract_strided_slice %127 {offsets = [0, 0], sizes = [16, 32], strides = [1, 1]} : vector<16x96xf32> to vector<16x32xf32>
    %133 = arith.mulf %132, %129 : vector<16x32xf32>
    %134 = arith.addf %131, %133 : vector<16x32xf32>
    %135 = vector.extract_strided_slice %127 {offsets = [0, 64], sizes = [16, 32], strides = [1, 1]} : vector<16x96xf32> to vector<16x32xf32>
    %136 = math.tanh %134 : vector<16x32xf32>
    %137 = arith.mulf %135, %136 : vector<16x32xf32>
    %c6_i32 = arith.constant 6 : i32
    %138 = arith.index_cast %c6_i32 : i32 to index
    %c0_37 = arith.constant 0 : index
    %c0_38 = arith.constant 0 : index
    %139 = vector.load %arg5[%138, %c0_37, %c0_38] : memref<8x16x128xf32, #tpu.memory_space<vmem>>, vector<1x16x128xf32>
    %140 = vector.shape_cast %139 : vector<1x16x128xf32> to vector<16x128xf32>
    %cst_39 = arith.constant dense<0.000000e+00> : vector<16x128xf32>
    %141 = tpu.matmul %137, %0, %cst_39 {dimension_numbers = #tpu.dot_dimension_numbers<[1], [0], [0], [1], [0, 0, 1, 1], [], []>} : vector<16x32xf32>, vector<32x128xf32>, vector<16x128xf32> -> vector<16x128xf32>
    %142 = arith.addf %140, %141 : vector<16x128xf32>
    %143 = vector.extract_strided_slice %142 {offsets = [0, 0], sizes = [16, 96], strides = [1, 1]} : vector<16x128xf32> to vector<16x96xf32>
    %144 = arith.negf %143 : vector<16x96xf32>
    %145 = math.exp %144 : vector<16x96xf32>
    %cst_40 = arith.constant 1.000000e+00 : f32
    %146 = vector.broadcast %cst_40 : f32 to vector<16x96xf32>
    %147 = arith.addf %146, %145 : vector<16x96xf32>
    %148 = arith.divf %146, %147 : vector<16x96xf32>
    %149 = vector.extract_strided_slice %142 {offsets = [0, 96], sizes = [16, 32], strides = [1, 1]} : vector<16x128xf32> to vector<16x32xf32>
    %150 = math.tanh %149 : vector<16x32xf32>
    %151 = vector.extract_strided_slice %148 {offsets = [0, 32], sizes = [16, 32], strides = [1, 1]} : vector<16x96xf32> to vector<16x32xf32>
    %152 = arith.mulf %151, %134 : vector<16x32xf32>
    %153 = vector.extract_strided_slice %148 {offsets = [0, 0], sizes = [16, 32], strides = [1, 1]} : vector<16x96xf32> to vector<16x32xf32>
    %154 = arith.mulf %153, %150 : vector<16x32xf32>
    %155 = arith.addf %152, %154 : vector<16x32xf32>
    %156 = vector.extract_strided_slice %148 {offsets = [0, 64], sizes = [16, 32], strides = [1, 1]} : vector<16x96xf32> to vector<16x32xf32>
    %157 = math.tanh %155 : vector<16x32xf32>
    %158 = arith.mulf %156, %157 : vector<16x32xf32>
    %c7_i32 = arith.constant 7 : i32
    %159 = arith.index_cast %c7_i32 : i32 to index
    %c0_41 = arith.constant 0 : index
    %c0_42 = arith.constant 0 : index
    %160 = vector.load %arg5[%159, %c0_41, %c0_42] : memref<8x16x128xf32, #tpu.memory_space<vmem>>, vector<1x16x128xf32>
    %161 = vector.shape_cast %160 : vector<1x16x128xf32> to vector<16x128xf32>
    %cst_43 = arith.constant dense<0.000000e+00> : vector<16x128xf32>
    %162 = tpu.matmul %158, %0, %cst_43 {dimension_numbers = #tpu.dot_dimension_numbers<[1], [0], [0], [1], [0, 0, 1, 1], [], []>} : vector<16x32xf32>, vector<32x128xf32>, vector<16x128xf32> -> vector<16x128xf32>
    %163 = arith.addf %161, %162 : vector<16x128xf32>
    %164 = vector.extract_strided_slice %163 {offsets = [0, 0], sizes = [16, 96], strides = [1, 1]} : vector<16x128xf32> to vector<16x96xf32>
    %165 = arith.negf %164 : vector<16x96xf32>
    %166 = math.exp %165 : vector<16x96xf32>
    %cst_44 = arith.constant 1.000000e+00 : f32
    %167 = vector.broadcast %cst_44 : f32 to vector<16x96xf32>
    %168 = arith.addf %167, %166 : vector<16x96xf32>
    %169 = arith.divf %167, %168 : vector<16x96xf32>
    %170 = vector.extract_strided_slice %163 {offsets = [0, 96], sizes = [16, 32], strides = [1, 1]} : vector<16x128xf32> to vector<16x32xf32>
    %171 = math.tanh %170 : vector<16x32xf32>
    %172 = vector.extract_strided_slice %169 {offsets = [0, 32], sizes = [16, 32], strides = [1, 1]} : vector<16x96xf32> to vector<16x32xf32>
    %173 = arith.mulf %172, %155 : vector<16x32xf32>
    %174 = vector.extract_strided_slice %169 {offsets = [0, 0], sizes = [16, 32], strides = [1, 1]} : vector<16x96xf32> to vector<16x32xf32>
    %175 = arith.mulf %174, %171 : vector<16x32xf32>
    %176 = arith.addf %173, %175 : vector<16x32xf32>
    %177 = vector.extract_strided_slice %169 {offsets = [0, 64], sizes = [16, 32], strides = [1, 1]} : vector<16x96xf32> to vector<16x32xf32>
    %178 = math.tanh %176 : vector<16x32xf32>
    %179 = arith.mulf %177, %178 : vector<16x32xf32>
    %c8_i32 = arith.constant 8 : i32
    %180 = vector.extract_strided_slice %179 {offsets = [0, 0], sizes = [8, 32], strides = [1, 1]} : vector<16x32xf32> to vector<8x32xf32>
    %181 = vector.extract_strided_slice %179 {offsets = [8, 0], sizes = [8, 32], strides = [1, 1]} : vector<16x32xf32> to vector<8x32xf32>
    %cst_45 = arith.constant dense<0.000000e+00> : vector<32xf32>
    %182 = vector.multi_reduction <add>, %180, %cst_45 [0] : vector<8x32xf32> to vector<32xf32>
    %183 = vector.shape_cast %182 : vector<32xf32> to vector<1x32xf32>
    %cst_46 = arith.constant 8.000000e+00 : f32
    %184 = vector.broadcast %cst_46 : f32 to vector<1x32xf32>
    %185 = arith.divf %183, %184 : vector<1x32xf32>
    %186 = vector.broadcast %185 : vector<1x32xf32> to vector<8x32xf32>
    %187 = arith.subf %180, %186 : vector<8x32xf32>
    %188 = arith.mulf %187, %187 : vector<8x32xf32>
    %cst_47 = arith.constant dense<0.000000e+00> : vector<32xf32>
    %189 = vector.multi_reduction <add>, %188, %cst_47 [0] : vector<8x32xf32> to vector<32xf32>
    %190 = vector.shape_cast %189 : vector<32xf32> to vector<1x32xf32>
    %cst_48 = arith.constant 7.000000e+00 : f32
    %191 = vector.broadcast %cst_48 : f32 to vector<1x32xf32>
    %192 = arith.divf %190, %191 : vector<1x32xf32>
    %193 = math.sqrt %192 : vector<1x32xf32>
    %cst_49 = arith.constant 1.000000e-03 : f32
    %194 = vector.broadcast %cst_49 : f32 to vector<1x32xf32>
    %195 = arith.addf %193, %194 : vector<1x32xf32>
    %196 = vector.broadcast %195 : vector<1x32xf32> to vector<8x32xf32>
    %197 = arith.divf %187, %196 : vector<8x32xf32>
    %cst_50 = arith.constant dense<0.000000e+00> : vector<32xf32>
    %198 = vector.multi_reduction <add>, %181, %cst_50 [0] : vector<8x32xf32> to vector<32xf32>
    %199 = vector.shape_cast %198 : vector<32xf32> to vector<1x32xf32>
    %cst_51 = arith.constant 8.000000e+00 : f32
    %200 = vector.broadcast %cst_51 : f32 to vector<1x32xf32>
    %201 = arith.divf %199, %200 : vector<1x32xf32>
    %202 = vector.broadcast %201 : vector<1x32xf32> to vector<8x32xf32>
    %203 = arith.subf %181, %202 : vector<8x32xf32>
    %204 = arith.mulf %203, %203 : vector<8x32xf32>
    %cst_52 = arith.constant dense<0.000000e+00> : vector<32xf32>
    %205 = vector.multi_reduction <add>, %204, %cst_52 [0] : vector<8x32xf32> to vector<32xf32>
    %206 = vector.shape_cast %205 : vector<32xf32> to vector<1x32xf32>
    %cst_53 = arith.constant 7.000000e+00 : f32
    %207 = vector.broadcast %cst_53 : f32 to vector<1x32xf32>
    %208 = arith.divf %206, %207 : vector<1x32xf32>
    %209 = math.sqrt %208 : vector<1x32xf32>
    %cst_54 = arith.constant 1.000000e-03 : f32
    %210 = vector.broadcast %cst_54 : f32 to vector<1x32xf32>
    %211 = arith.addf %209, %210 : vector<1x32xf32>
    %212 = vector.broadcast %211 : vector<1x32xf32> to vector<8x32xf32>
    %213 = arith.divf %203, %212 : vector<8x32xf32>
    %cst_55 = arith.constant dense<0.000000e+00> : vector<32x32xf32>
    %214 = tpu.matmul %197, %213, %cst_55 {dimension_numbers = #tpu.dot_dimension_numbers<[0], [0], [1], [1], [0, 1, 1, 1], [], []>} : vector<8x32xf32>, vector<8x32xf32>, vector<32x32xf32> -> vector<32x32xf32>
    %cst_56 = arith.constant 8.000000e+00 : f32
    %215 = vector.broadcast %cst_56 : f32 to vector<32x32xf32>
    %216 = arith.divf %214, %215 : vector<32x32xf32>
    %217 = tpu.iota {dimensions = array<i32: 0>} : vector<32x32xi32>
    %218 = tpu.iota {dimensions = array<i32: 1>} : vector<32x32xi32>
    %219 = arith.cmpi eq, %217, %218 : vector<32x32xi32>
    %220 = arith.extui %219 : vector<32x32xi1> to vector<32x32xi32>
    %221 = arith.sitofp %220 : vector<32x32xi32> to vector<32x32xf32>
    %222 = arith.subf %216, %221 : vector<32x32xf32>
    %223 = arith.mulf %222, %222 : vector<32x32xf32>
    %224 = vector.shape_cast %223 : vector<32x32xf32> to vector<1x32x32xf32>
    %cst_57 = arith.constant dense<0.000000e+00> : vector<1xf32>
    %225 = vector.multi_reduction <add>, %224, %cst_57 [1, 2] : vector<1x32x32xf32> to vector<1xf32>
    %226 = vector.shape_cast %225 : vector<1xf32> to vector<1x1x1xf32>
    %227 = vector.extract %226[0, 0, 0] : f32 from vector<1x1x1xf32>
    %cst_58 = arith.constant 2.000000e-03 : f32
    %228 = arith.mulf %cst_58, %227 : f32
    %229 = arith.mulf %221, %223 : vector<32x32xf32>
    %230 = vector.shape_cast %229 : vector<32x32xf32> to vector<1x32x32xf32>
    %cst_59 = arith.constant dense<0.000000e+00> : vector<1xf32>
    %231 = vector.multi_reduction <add>, %230, %cst_59 [1, 2] : vector<1x32x32xf32> to vector<1xf32>
    %232 = vector.shape_cast %231 : vector<1xf32> to vector<1x1x1xf32>
    %233 = vector.extract %232[0, 0, 0] : f32 from vector<1x1x1xf32>
    %cst_60 = arith.constant 9.980000e-01 : f32
    %234 = arith.mulf %cst_60, %233 : f32
    %235 = arith.addf %228, %234 : f32
    %c0_61 = arith.constant 0 : index
    %236 = memref.load %arg4[%c0_61] : memref<1xf32, #tpu.memory_space<smem>>
    memref.store %235, %arg4[%c0_61] : memref<1xf32, #tpu.memory_space<smem>>
    return
  }
}

</mosaic_0001>

<llo_original>
// kernel: tpu_custom_call.1
$region0: #{tpu_custom_call.1}
  #allocation0 [shape = 'u32[]', space=smem, size = 0x4, offset = 0x4, fixed_abs, tag = 'smem constant byte address 0x4 - core index']
  #allocation1 [shape = 'u32[144,128]{1,0:T(1,128)}', space=vmem, size = 0x12000, scoped, tag = 'internal scratch']
  #allocation2 [shape = 'f32[8,16,128]{2,1,0:T(8,128)}', space=vmem, size = 0x10000, scoped, tag = 'scratch operand']
  %s0 = inlined_call_operand.hbm [shape: f32[8,16,16], index: 0, kind: input, shape index: {}]
  %s1 = inlined_call_operand.hbm [shape: f32[16,128], index: 1, kind: input, shape index: {}]
  %s2 = inlined_call_operand.hbm [shape: f32[32,128], index: 2, kind: input, shape index: {}]
  %s3 = inlined_call_operand.vmem [shape: f32[1,128], index: 3, kind: input, shape index: {}]
  %s4 = inlined_call_operand.hbm [shape: f32[1], index: 4, kind: output, shape index: {}]
  %s5 = sld [smem:[#allocation0]]
  $region38: #{tpu_custom_call.1} parent=0
    _
  %s7 = ssub.s32 1, %s5
  %s8 = scalar_select 0, %s7, %s5
  $region1: #{tpu_custom_call.1} parent=0
    #allocation3 [shape = 'u8[65536]{0}', space=vmem, size = 0x10000, scoped, tag = 'input window, operand 0, single buffered']
    #allocation4 [shape = 's32[1]{0}', space=sflag, size = 0x4, scoped, tag = 'scoped memory for tpu_custom_call.1']
    #allocation5 [shape = 's32[1]{0}', space=sflag, size = 0x4, scoped, tag = 'scoped memory for tpu_custom_call.1']
    #allocation6 [shape = 'u8[8192]{0}', space=vmem, size = 0x2000, scoped, tag = 'input window, operand 1, single buffered']
    #allocation7 [shape = 's32[1]{0}', space=sflag, size = 0x4, scoped, tag = 'scoped memory for tpu_custom_call.1']
    #allocation8 [shape = 'u8[16384]{0}', space=vmem, size = 0x4000, scoped, tag = 'input window, operand 2, single buffered']
    #allocation9 [shape = 'u8[512]{0}', space=smem, size = 0x200, scoped, tag = 'output window, operand 0, single buffered']
    %9 = vsyncpa [#allocation4], 0
    %10 = vsyncpa [#allocation7], 0
    %11 = vsyncpa [#allocation5], 0
    // Predicated region
    $region2: #{tpu_custom_call.1} parent=1 // pred_check
      _
    $region3: #{tpu_custom_call.1} parent=1 // pred_check_branch
      %13 = sbr.rel (0) target = $region5
    $region4: #{tpu_custom_call.1} parent=1 // pred_region
      %s15 = ssub.s32 2048, 2048
      %16 = vsyncadd [#allocation4], %s15
      %s17 = sshll.u32 [#allocation3], 4
      %s18 = int_to_ptr.vmem [resolvable:$true] %s17
      %23 = dma.hbm_to_vmem [thread:$0]  %s0, 2048, %s18, [#allocation4], 128, 128, 8
    $region5: #{tpu_custom_call.1} parent=1 // pred_fallthru
      _
    // Predicated region
    $region6: #{tpu_custom_call.1} parent=1 // pred_check
      _
    $region7: #{tpu_custom_call.1} parent=1 // pred_check_branch
      %25 = sbr.rel (0) target = $region9
    $region8: #{tpu_custom_call.1} parent=1 // pred_region
      %s27 = ssub.s32 256, 256
      %28 = vsyncadd [#allocation7], %s27
      %s29 = sshll.u32 [#allocation6], 4
      %s30 = int_to_ptr.vmem [resolvable:$true] %s29
      %35 = dma.hbm_to_vmem [thread:$0]  %s1, 256, %s30, [#allocation7], 128, 128, 8
    $region9: #{tpu_custom_call.1} parent=1 // pred_fallthru
      _
    // Predicated region
    $region10: #{tpu_custom_call.1} parent=1 // pred_check
      _
    $region11: #{tpu_custom_call.1} parent=1 // pred_check_branch
      %37 = sbr.rel (0) target = $region13
    $region12: #{tpu_custom_call.1} parent=1 // pred_region
      %s39 = ssub.s32 512, 512
      %40 = vsyncadd [#allocation7], %s39
      %s41 = sshll.u32 [#allocation8], 4
      %s42 = int_to_ptr.vmem [resolvable:$true] %s41
      %47 = dma.hbm_to_vmem [thread:$0]  %s2, 512, %s42, [#allocation7], 128, 128, 8
    $region13: #{tpu_custom_call.1} parent=1 // pred_fallthru
      _
    // Predicated region
    $region14: #{tpu_custom_call.1} parent=1 // pred_check
      _
    $region15: #{tpu_custom_call.1} parent=1 // pred_check_branch
      %49 = sbr.rel (0) target = $region17
    $region16: #{tpu_custom_call.1} parent=1 // pred_region
      _
    $region17: #{tpu_custom_call.1} parent=1 // pred_fallthru
      _
    // Predicated region
    $region18: #{tpu_custom_call.1} parent=1 // pred_check
      _
    $region19: #{tpu_custom_call.1} parent=1 // pred_check_branch
      %51 = sbr.rel (0) target = $region21
    $region20: #{tpu_custom_call.1} parent=1 // pred_region
      %52 = dma.done [#allocation4], 2048
    $region21: #{tpu_custom_call.1} parent=1 // pred_fallthru
      _
    // Predicated region
    $region22: #{tpu_custom_call.1} parent=1 // pred_check
      _
    $region23: #{tpu_custom_call.1} parent=1 // pred_check_branch
      %54 = sbr.rel (0) target = $region25
    $region24: #{tpu_custom_call.1} parent=1 // pred_region
      %55 = dma.done [#allocation7], 256
    $region25: #{tpu_custom_call.1} parent=1 // pred_fallthru
      _
    // Predicated region
    $region26: #{tpu_custom_call.1} parent=1 // pred_check
      _
    $region27: #{tpu_custom_call.1} parent=1 // pred_check_branch
      %57 = sbr.rel (0) target = $region29
    $region28: #{tpu_custom_call.1} parent=1 // pred_region
      %58 = dma.done [#allocation7], 512
    $region29: #{tpu_custom_call.1} parent=1 // pred_fallthru
      _
    %v59 = vld [vmem:[#allocation8] sm:$0xff]
    %v60 = vld [vmem:[#allocation8 + $0x8] sm:$0xff]
    %v61 = vld [vmem:[#allocation8 + $0x10] sm:$0xff]
    %v62 = vld [vmem:[#allocation8 + $0x18] sm:$0xff]
    %v63 = vld [vmem:[#allocation3] sm:$0xff]
    %v64 = vld [vmem:[#allocation3 + $0x8] sm:$0xff]
    %v65 = vld [vmem:[#allocation3 + $0x10] sm:$0xff]
    %v66 = vld [vmem:[#allocation3 + $0x18] sm:$0xff]
    %v67 = vld [vmem:[#allocation3 + $0x20] sm:$0xff]
    %v68 = vld [vmem:[#allocation3 + $0x28] sm:$0xff]
    %v69 = vld [vmem:[#allocation3 + $0x30] sm:$0xff]
    %v70 = vld [vmem:[#allocation3 + $0x38] sm:$0xff]
    %v71 = vld [vmem:[#allocation3 + $0x40] sm:$0xff]
    %v72 = vld [vmem:[#allocation3 + $0x48] sm:$0xff]
    %v73 = vld [vmem:[#allocation3 + $0x50] sm:$0xff]
    %v74 = vld [vmem:[#allocation3 + $0x58] sm:$0xff]
    %v75 = vld [vmem:[#allocation3 + $0x60] sm:$0xff]
    %v76 = vld [vmem:[#allocation3 + $0x68] sm:$0xff]
    %v77 = vld [vmem:[#allocation3 + $0x70] sm:$0xff]
    %v78 = vld [vmem:[#allocation3 + $0x78] sm:$0xff]
    %v79 = vld [vmem:[#allocation6] sm:$0xff]
    %v80 = vld [vmem:[#allocation6 + $0x8] sm:$0xff]
    %v81 = vld [vmem:[%s3] sm:$0x1]
    %v83 = vlaneseq
    %v84 = vshrl.u32 %v83, 7
    %v85 = vsub.s32 0, %v84
    %v86 = vrot.slane %v81, %v85
    %vm88 = vcmask 130048
    %v90 = vsel %vm88, %v63, 0
    %v93 = vsel %vm88, %v64, 0
    %v96 = vsel %vm88, %v65, 0
    %v99 = vsel %vm88, %v66, 0
    %v102 = vsel %vm88, %v67, 0
    %v105 = vsel %vm88, %v68, 0
    %v108 = vsel %vm88, %v69, 0
    %v111 = vsel %vm88, %v70, 0
    %v114 = vsel %vm88, %v71, 0
    %v117 = vsel %vm88, %v72, 0
    %v120 = vsel %vm88, %v73, 0
    %v123 = vsel %vm88, %v74, 0
    %v126 = vsel %vm88, %v75, 0
    %v129 = vsel %vm88, %v76, 0
    %v132 = vsel %vm88, %v77, 0
    %v135 = vsel %vm88, %v78, 0
    %137 = vmatprep.subr.mxu0 0.0
    %138 = vmatpush1.msra.mxu0 %v79
    %139 = vmatprep.subr.mxu0 0.0
    %140 = vmatpush1.msra.mxu0 %v80
    %141 = vmatprep.subr.mxu0 0.0
    %142 = vmatpush1.msra.mxu0 0.0
    %143 = vmatprep.subr.mxu0 0.0
    %144 = vmatpush1.msra.mxu0 0.0
    %145 = vmatprep.subr.mxu0 0.0
    %146 = vmatpush1.msra.mxu0 0.0
    %147 = vmatprep.subr.mxu0 0.0
    %148 = vmatpush1.msra.mxu0 0.0
    %149 = vmatprep.subr.mxu0 0.0
    %150 = vmatpush1.msra.mxu0 0.0
    %151 = vmatprep.subr.mxu0 0.0
    %152 = vmatpush1.msra.mxu0 0.0
    %153 = vmatprep.subr.mxu0 0.0
    %154 = vmatpush1.msra.mxu0 0.0
    %155 = vmatprep.subr.mxu0 0.0
    %156 = vmatpush1.msra.mxu0 0.0
    %157 = vmatprep.subr.mxu0 0.0
    %158 = vmatpush1.msra.mxu0 0.0
    %159 = vmatprep.subr.mxu0 0.0
    %160 = vmatpush1.msra.mxu0 0.0
    %161 = vmatprep.subr.mxu0 0.0
    %162 = vmatpush1.msra.mxu0 0.0
    %163 = vmatprep.subr.mxu0 0.0
    %164 = vmatpush1.msra.mxu0 0.0
    %165 = vmatprep.subr.mxu0 0.0
    %166 = vmatpush1.msra.mxu0 0.0
    %167 = vmatprep.subr.mxu0 0.0
    %168 = vmatpush1.msra.mxu0 0.0
    %169 = vmatprep.subr.mxu0 0.0
    %170 = vmatpush1.msra.mxu0 0.0
    %171 = vmatprep.subr.mxu0 0.0
    %172 = vmatpush1.msra.mxu0 0.0
    %173 = vmatprep.subr.mxu0 0.0
    %174 = vmatpush1.msra.mxu0 0.0
    %175 = vmatprep.subr.mxu0 0.0
    %176 = vmatpush1.msra.mxu0 0.0
    %177 = vmatprep.subr.mxu0 0.0
    %178 = vmatpush1.msra.mxu0 0.0
    %179 = vmatprep.subr.mxu0 0.0
    %180 = vmatpush1.msra.mxu0 0.0
    %181 = vmatprep.subr.mxu0 0.0
    %182 = vmatpush1.msra.mxu0 0.0
    %183 = vmatprep.subr.mxu0 0.0
    %184 = vmatpush1.msra.mxu0 0.0
    %185 = vmatprep.subr.mxu0 0.0
    %186 = vmatpush1.msra.mxu0 0.0
    %187 = vmatprep.subr.mxu0 0.0
    %188 = vmatpush1.msra.mxu0 0.0
    %189 = vmatprep.subr.mxu0 0.0
    %190 = vmatpush1.msra.mxu0 0.0
    %191 = vmatprep.subr.mxu0 0.0
    %192 = vmatpush1.msra.mxu0 0.0
    %193 = vmatprep.subr.mxu0 0.0
    %194 = vmatpush1.msra.mxu0 0.0
    %195 = vmatprep.subr.mxu0 0.0
    %196 = vmatpush1.msra.mxu0 0.0
    %197 = vmatprep.subr.mxu0 0.0
    %198 = vmatpush1.msra.mxu0 0.0
    %199 = vmatprep.subr.mxu0 0.0
    %200 = vmatpush1.msra.mxu0 0.0
    %201 = vmatprep.mubr.f32.mxu0 0.0
    %202 = vmatmul.mubr.f32.gmra.mrb[0].mxu0 %v90
    %v203 = vpop.f32.mrb[0].mxu0
    %v204 = vadd.f32 %v86, %v203
    %v205 = vpop.f32.mrb[0].mxu0
    %206 = vmatprep.mubr.f32.mxu0 0.0
    %207 = vmatmul.mubr.f32.gmra.mrb[0].mxu0 %v93
    %v208 = vpop.f32.mrb[0].mxu0
    %v209 = vadd.f32 %v86, %v208
    %v210 = vpop.f32.mrb[0].mxu0
    %211 = vmatprep.mubr.f32.mxu0 0.0
    %212 = vmatmul.mubr.f32.gmra.mrb[0].mxu0 %v96
    %v213 = vpop.f32.mrb[0].mxu0
    %v214 = vadd.f32 %v86, %v213
    %v215 = vpop.f32.mrb[0].mxu0
    %216 = vmatprep.mubr.f32.mxu0 0.0
    %217 = vmatmul.mubr.f32.gmra.mrb[0].mxu0 %v99
    %v218 = vpop.f32.mrb[0].mxu0
    %v219 = vadd.f32 %v86, %v218
    %v220 = vpop.f32.mrb[0].mxu0
    %221 = vmatprep.mubr.f32.mxu0 0.0
    %222 = vmatmul.mubr.f32.gmra.mrb[0].mxu0 %v102
    %v223 = vpop.f32.mrb[0].mxu0
    %v224 = vadd.f32 %v86, %v223
    %v225 = vpop.f32.mrb[0].mxu0
    %226 = vmatprep.mubr.f32.mxu0 0.0
    %227 = vmatmul.mubr.f32.gmra.mrb[0].mxu0 %v105
    %v228 = vpop.f32.mrb[0].mxu0
    %v229 = vadd.f32 %v86, %v228
    %v230 = vpop.f32.mrb[0].mxu0
    %231 = vmatprep.mubr.f32.mxu0 0.0
    %232 = vmatmul.mubr.f32.gmra.mrb[0].mxu0 %v108
    %v233 = vpop.f32.mrb[0].mxu0
    %v234 = vadd.f32 %v86, %v233
    %v235 = vpop.f32.mrb[0].mxu0
    %236 = vmatprep.mubr.f32.mxu0 0.0
    %237 = vmatmul.mubr.f32.gmra.mrb[0].mxu0 %v111
    %v238 = vpop.f32.mrb[0].mxu0
    %v239 = vadd.f32 %v86, %v238
    %v240 = vpop.f32.mrb[0].mxu0
    %241 = vmatprep.mubr.f32.mxu0 0.0
    %242 = vmatmul.mubr.f32.gmra.mrb[0].mxu0 %v114
    %v243 = vpop.f32.mrb[0].mxu0
    %v244 = vadd.f32 %v86, %v243
    %v245 = vpop.f32.mrb[0].mxu0
    %246 = vmatprep.mubr.f32.mxu0 0.0
    %247 = vmatmul.mubr.f32.gmra.mrb[0].mxu0 %v117
    %v248 = vpop.f32.mrb[0].mxu0
    %v249 = vadd.f32 %v86, %v248
    %v250 = vpop.f32.mrb[0].mxu0
    %251 = vmatprep.mubr.f32.mxu0 0.0
    %252 = vmatmul.mubr.f32.gmra.mrb[0].mxu0 %v120
    %v253 = vpop.f32.mrb[0].mxu0
    %v254 = vadd.f32 %v86, %v253
    %v255 = vpop.f32.mrb[0].mxu0
    %256 = vmatprep.mubr.f32.mxu0 0.0
    %257 = vmatmul.mubr.f32.gmra.mrb[0].mxu0 %v123
    %v258 = vpop.f32.mrb[0].mxu0
    %v259 = vadd.f32 %v86, %v258
    %v260 = vpop.f32.mrb[0].mxu0
    %261 = vmatprep.mubr.f32.mxu0 0.0
    %262 = vmatmul.mubr.f32.gmra.mrb[0].mxu0 %v126
    %v263 = vpop.f32.mrb[0].mxu0
    %v264 = vadd.f32 %v86, %v263
    %v265 = vpop.f32.mrb[0].mxu0
    %266 = vmatprep.mubr.f32.mxu0 0.0
    %267 = vmatmul.mubr.f32.gmra.mrb[0].mxu0 %v129
    %v268 = vpop.f32.mrb[0].mxu0
    %v269 = vadd.f32 %v86, %v268
    %v270 = vpop.f32.mrb[0].mxu0
    %271 = vmatprep.mubr.f32.mxu0 0.0
    %272 = vmatmul.mubr.f32.gmra.mrb[0].mxu0 %v132
    %v273 = vpop.f32.mrb[0].mxu0
    %v274 = vadd.f32 %v86, %v273
    %v275 = vpop.f32.mrb[0].mxu0
    %276 = vmatprep.mubr.f32.mxu0 0.0
    %277 = vmatmul.mubr.f32.gmra.mrb[0].mxu0 %v135
    %v278 = vpop.f32.mrb[0].mxu0
    %v279 = vadd.f32 %v86, %v278
    %v280 = vpop.f32.mrb[0].mxu0
    %281 = vdwg.mxu0
    %282 = vst [vmem:[#allocation2] sm:$0xff] %v204
    %283 = vst [vmem:[#allocation2 + $0x8] sm:$0xff] %v209
    %284 = vst [vmem:[#allocation2 + $0x10] sm:$0xff] %v214
    %285 = vst [vmem:[#allocation2 + $0x18] sm:$0xff] %v219
    %286 = vst [vmem:[#allocation2 + $0x20] sm:$0xff] %v224
    %287 = vst [vmem:[#allocation2 + $0x28] sm:$0xff] %v229
    %288 = vst [vmem:[#allocation2 + $0x30] sm:$0xff] %v234
    %289 = vst [vmem:[#allocation2 + $0x38] sm:$0xff] %v239
    %290 = vst [vmem:[#allocation2 + $0x40] sm:$0xff] %v244
    %291 = vst [vmem:[#allocation2 + $0x48] sm:$0xff] %v249
    %292 = vst [vmem:[#allocation2 + $0x50] sm:$0xff] %v254
    %293 = vst [vmem:[#allocation2 + $0x58] sm:$0xff] %v259
    %294 = vst [vmem:[#allocation2 + $0x60] sm:$0xff] %v264
    %295 = vst [vmem:[#allocation2 + $0x68] sm:$0xff] %v269
    %296 = vst [vmem:[#allocation2 + $0x70] sm:$0xff] %v274
    %297 = vst [vmem:[#allocation2 + $0x78] sm:$0xff] %v279
    %v298 = vld [vmem:[#allocation2] sm:$0xff]
    %v299 = vld [vmem:[#allocation2 + $0x8] sm:$0xff]
    %vm300 = vcmask 261120
    %v302 = vsel %vm300, 0.0, 0
    %304 = vmatprep.subr.mxu0 0.0
    %305 = vmatpush1.msra.mxu0 %v59
    %306 = vmatprep.subr.mxu0 0.0
    %307 = vmatpush1.msra.mxu0 %v60
    %308 = vmatprep.subr.mxu0 0.0
    %309 = vmatpush1.msra.mxu0 %v61
    %310 = vmatprep.subr.mxu0 0.0
    %311 = vmatpush1.msra.mxu0 %v62
    %312 = vmatprep.subr.mxu0 0.0
    %313 = vmatpush1.msra.mxu0 0.0
    %314 = vmatprep.subr.mxu0 0.0
    %315 = vmatpush1.msra.mxu0 0.0
    %316 = vmatprep.subr.mxu0 0.0
    %317 = vmatpush1.msra.mxu0 0.0
    %318 = vmatprep.subr.mxu0 0.0
    %319 = vmatpush1.msra.mxu0 0.0
    %320 = vmatprep.subr.mxu0 0.0
    %321 = vmatpush1.msra.mxu0 0.0
    %322 = vmatprep.subr.mxu0 0.0
    %323 = vmatpush1.msra.mxu0 0.0
    %324 = vmatprep.subr.mxu0 0.0
    %325 = vmatpush1.msra.mxu0 0.0
    %326 = vmatprep.subr.mxu0 0.0
    %327 = vmatpush1.msra.mxu0 0.0
    %328 = vmatprep.subr.mxu0 0.0
    %329 = vmatpush1.msra.mxu0 0.0
    %330 = vmatprep.subr.mxu0 0.0
    %331 = vmatpush1.msra.mxu0 0.0
    %332 = vmatprep.subr.mxu0 0.0
    %333 = vmatpush1.msra.mxu0 0.0
    %334 = vmatprep.subr.mxu0 0.0
    %335 = vmatpush1.msra.mxu0 0.0
    %336 = vmatprep.subr.mxu0 0.0
    %337 = vmatpush1.msra.mxu0 0.0
    %338 = vmatprep.subr.mxu0 0.0
    %339 = vmatpush1.msra.mxu0 0.0
    %340 = vmatprep.subr.mxu0 0.0
    %341 = vmatpush1.msra.mxu0 0.0
    %342 = vmatprep.subr.mxu0 0.0
    %343 = vmatpush1.msra.mxu0 0.0
    %344 = vmatprep.subr.mxu0 0.0
    %345 = vmatpush1.msra.mxu0 0.0
    %346 = vmatprep.subr.mxu0 0.0
    %347 = vmatpush1.msra.mxu0 0.0
    %348 = vmatprep.subr.mxu0 0.0
    %349 = vmatpush1.msra.mxu0 0.0
    %350 = vmatprep.subr.mxu0 0.0
    %351 = vmatpush1.msra.mxu0 0.0
    %352 = vmatprep.subr.mxu0 0.0
    %353 = vmatpush1.msra.mxu0 0.0
    %354 = vmatprep.subr.mxu0 0.0
    %355 = vmatpush1.msra.mxu0 0.0
    %356 = vmatprep.subr.mxu0 0.0
    %357 = vmatpush1.msra.mxu0 0.0
    %358 = vmatprep.subr.mxu0 0.0
    %359 = vmatpush1.msra.mxu0 0.0
    %360 = vmatprep.subr.mxu0 0.0
    %361 = vmatpush1.msra.mxu0 0.0
    %362 = vmatprep.subr.mxu0 0.0
    %363 = vmatpush1.msra.mxu0 0.0
    %364 = vmatprep.subr.mxu0 0.0
    %365 = vmatpush1.msra.mxu0 0.0
    %366 = vmatprep.subr.mxu0 0.0
    %367 = vmatpush1.msra.mxu0 0.0
    %368 = vmatprep.mubr.f32.mxu0 0.0
    %369 = vmatmul.mubr.f32.gmra.mrb[0].mxu0 %v302
    %v370 = vpop.f32.mrb[0].mxu0
    %v371 = vadd.f32 0.0, %v370
    %v372 = vpop.f32.mrb[0].mxu0
    %373 = vmatprep.mubr.f32.mxu0 0.0
    %374 = vmatmul.mubr.f32.gmra.mrb[0].mxu0 %v302
    %v375 = vpop.f32.mrb[0].mxu0
    %v376 = vadd.f32 0.0, %v375
    %v377 = vpop.f32.mrb[0].mxu0
    %378 = vdwg.mxu0
    %v379 = vadd.f32 %v298, %v371
    %v380 = vadd.f32 %v299, %v376
    %v381 = vxor.u32 %v379, 2147483648
    %v382 = vxor.u32 %v380, 2147483648
    %v383 = vmul.f32 %v381, 1.442695
    %v384 = vpow.pop %v383
    %v385 = vmul.f32 %v382, 1.442695
    %v386 = vpow.pop %v385
    %v387 = vadd.f32 %v384, 1.0
    %v388 = vadd.f32 %v386, 1.0
    %v389 = vrcp.pop %v387
    %v390 = vmul.f32 1.0, %v389
    %v391 = vrcp.pop %v388
    %v392 = vmul.f32 1.0, %v391
    %v393 = vtanh.pop %v379
    %v394 = vtanh.pop %v380
    %v395 = vmul.f32 %v390, 0.0
    %v396 = vmul.f32 %v392, 0.0
    %399 = vrot.lane.b32.xlu0 %v393, 32
    %v400 = vpop.permute.xlu0 %399
    %401 = vrot.lane.b32.xlu0 %v394, 32
    %v402 = vpop.permute.xlu0 %401
    %v405 = vmul.f32 %v390, %v400
    %v406 = vmul.f32 %v392, %v402
    %409 = vrot.lane.b32.xlu0 %v405, 32
    %v410 = vpop.permute.xlu0 %409
    %411 = vrot.lane.b32.xlu0 %v406, 32
    %v412 = vpop.permute.xlu0 %411
    %v415 = vadd.f32 %v395, %v410
    %v416 = vadd.f32 %v396, %v412
    %v417 = vtanh.pop %v415
    %v418 = vtanh.pop %v416
    %421 = vrot.lane.b32.xlu0 %v417, 32
    %v422 = vpop.permute.xlu0 %421
    %423 = vrot.lane.b32.xlu0 %v418, 32
    %v424 = vpop.permute.xlu0 %423
    %v427 = vmul.f32 %v390, %v422
    %v428 = vmul.f32 %v392, %v424
    %s429 = scalar_lea.vmem [#allocation2], 16
    %v430 = vld [vmem:[%s429] sm:$0xff]
    %v431 = vld [vmem:[%s429 + $0x8] sm:$0xff]
    %434 = vrot.lane.b32.xlu0 %v427, 64
    %v435 = vpop.permute.xlu0 %434
    %436 = vrot.lane.b32.xlu0 %v428, 64
    %v437 = vpop.permute.xlu0 %436
    %v438 = vsel %vm300, %v435, 0
    %v440 = vsel %vm300, %v437, 0
    %442 = vmatprep.subr.mxu0 0.0
    %443 = vmatpush1.msra.mxu0 %v59
    %444 = vmatprep.subr.mxu0 0.0
    %445 = vmatpush1.msra.mxu0 %v60
    %446 = vmatprep.subr.mxu0 0.0
    %447 = vmatpush1.msra.mxu0 %v61
    %448 = vmatprep.subr.mxu0 0.0
    %449 = vmatpush1.msra.mxu0 %v62
    %450 = vmatprep.subr.mxu0 0.0
    %451 = vmatpush1.msra.mxu0 0.0
    %452 = vmatprep.subr.mxu0 0.0
    %453 = vmatpush1.msra.mxu0 0.0
    %454 = vmatprep.subr.mxu0 0.0
    %455 = vmatpush1.msra.mxu0 0.0
    %456 = vmatprep.subr.mxu0 0.0
    %457 = vmatpush1.msra.mxu0 0.0
    %458 = vmatprep.subr.mxu0 0.0
    %459 = vmatpush1.msra.mxu0 0.0
    %460 = vmatprep.subr.mxu0 0.0
    %461 = vmatpush1.msra.mxu0 0.0
    %462 = vmatprep.subr.mxu0 0.0
    %463 = vmatpush1.msra.mxu0 0.0
    %464 = vmatprep.subr.mxu0 0.0
    %465 = vmatpush1.msra.mxu0 0.0
    %466 = vmatprep.subr.mxu0 0.0
    %467 = vmatpush1.msra.mxu0 0.0
    %468 = vmatprep.subr.mxu0 0.0
    %469 = vmatpush1.msra.mxu0 0.0
    %470 = vmatprep.subr.mxu0 0.0
    %471 = vmatpush1.msra.mxu0 0.0
    %472 = vmatprep.subr.mxu0 0.0
    %473 = vmatpush1.msra.mxu0 0.0
    %474 = vmatprep.subr.mxu0 0.0
    %475 = vmatpush1.msra.mxu0 0.0
    %476 = vmatprep.subr.mxu0 0.0
    %477 = vmatpush1.msra.mxu0 0.0
    %478 = vmatprep.subr.mxu0 0.0
    %479 = vmatpush1.msra.mxu0 0.0
    %480 = vmatprep.subr.mxu0 0.0
    %481 = vmatpush1.msra.mxu0 0.0
    %482 = vmatprep.subr.mxu0 0.0
    %483 = vmatpush1.msra.mxu0 0.0
    %484 = vmatprep.subr.mxu0 0.0
    %485 = vmatpush1.msra.mxu0 0.0
    %486 = vmatprep.subr.mxu0 0.0
    %487 = vmatpush1.msra.mxu0 0.0
    %488 = vmatprep.subr.mxu0 0.0
    %489 = vmatpush1.msra.mxu0 0.0
    %490 = vmatprep.subr.mxu0 0.0
    %491 = vmatpush1.msra.mxu0 0.0
    %492 = vmatprep.subr.mxu0 0.0
    %493 = vmatpush1.msra.mxu0 0.0
    %494 = vmatprep.subr.mxu0 0.0
    %495 = vmatpush1.msra.mxu0 0.0
    %496 = vmatprep.subr.mxu0 0.0
    %497 = vmatpush1.msra.mxu0 0.0
    %498 = vmatprep.subr.mxu0 0.0
    %499 = vmatpush1.msra.mxu0 0.0
    %500 = vmatprep.subr.mxu0 0.0
    %501 = vmatpush1.msra.mxu0 0.0
    %502 = vmatprep.subr.mxu0 0.0
    %503 = vmatpush1.msra.mxu0 0.0
    %504 = vmatprep.subr.mxu0 0.0
    %505 = vmatpush1.msra.mxu0 0.0
    %506 = vmatprep.mubr.f32.mxu0 0.0
    %507 = vmatmul.mubr.f32.gmra.mrb[0].mxu0 %v438
    %v508 = vpop.f32.mrb[0].mxu0
    %v509 = vadd.f32 0.0, %v508
    %v510 = vpop.f32.mrb[0].mxu0
    %511 = vmatprep.mubr.f32.mxu0 0.0
    %512 = vmatmul.mubr.f32.gmra.mrb[0].mxu0 %v440
    %v513 = vpop.f32.mrb[0].mxu0
    %v514 = vadd.f32 0.0, %v513
    %v515 = vpop.f32.mrb[0].mxu0
    %516 = vdwg.mxu0
    %v517 = vadd.f32 %v430, %v509
    %v518 = vadd.f32 %v431, %v514
    %v519 = vxor.u32 %v517, 2147483648
    %v520 = vxor.u32 %v518, 2147483648
    %v521 = vmul.f32 %v519, 1.442695
    %v522 = vpow.pop %v521
    %v523 = vmul.f32 %v520, 1.442695
    %v524 = vpow.pop %v523
    %v525 = vadd.f32 %v522, 1.0
    %v526 = vadd.f32 %v524, 1.0
    %v527 = vrcp.pop %v525
    %v528 = vmul.f32 1.0, %v527
    %v529 = vrcp.pop %v526
    %v530 = vmul.f32 1.0, %v529
    %v531 = vtanh.pop %v517
    %v532 = vtanh.pop %v518
    %v533 = vmul.f32 %v528, %v415
    %v534 = vmul.f32 %v530, %v416
    %537 = vrot.lane.b32.xlu0 %v531, 32
    %v538 = vpop.permute.xlu0 %537
    %539 = vrot.lane.b32.xlu0 %v532, 32
    %v540 = vpop.permute.xlu0 %539
    %v543 = vmul.f32 %v528, %v538
    %v544 = vmul.f32 %v530, %v540
    %547 = vrot.lane.b32.xlu0 %v543, 32
    %v548 = vpop.permute.xlu0 %547
    %549 = vrot.lane.b32.xlu0 %v544, 32
    %v550 = vpop.permute.xlu0 %549
    %v553 = vadd.f32 %v533, %v548
    %v554 = vadd.f32 %v534, %v550
    %v555 = vtanh.pop %v553
    %v556 = vtanh.pop %v554
    %559 = vrot.lane.b32.xlu0 %v555, 32
    %v560 = vpop.permute.xlu0 %559
    %561 = vrot.lane.b32.xlu0 %v556, 32
    %v562 = vpop.permute.xlu0 %561
    %v565 = vmul.f32 %v528, %v560
    %v566 = vmul.f32 %v530, %v562
    %s567 = scalar_lea.vmem [#allocation2], 32
    %v568 = vld [vmem:[%s567] sm:$0xff]
    %v569 = vld [vmem:[%s567 + $0x8] sm:$0xff]
    %572 = vrot.lane.b32.xlu0 %v565, 64
    %v573 = vpop.permute.xlu0 %572
    %574 = vrot.lane.b32.xlu0 %v566, 64
    %v575 = vpop.permute.xlu0 %574
    %v576 = vsel %vm300, %v573, 0
    %v578 = vsel %vm300, %v575, 0
    %580 = vmatprep.subr.mxu0 0.0
    %581 = vmatpush1.msra.mxu0 %v59
    %582 = vmatprep.subr.mxu0 0.0
    %583 = vmatpush1.msra.mxu0 %v60
    %584 = vmatprep.subr.mxu0 0.0
    %585 = vmatpush1.msra.mxu0 %v61
    %586 = vmatprep.subr.mxu0 0.0
    %587 = vmatpush1.msra.mxu0 %v62
    %588 = vmatprep.subr.mxu0 0.0
    %589 = vmatpush1.msra.mxu0 0.0
    %590 = vmatprep.subr.mxu0 0.0
    %591 = vmatpush1.msra.mxu0 0.0
    %592 = vmatprep.subr.mxu0 0.0
    %593 = vmatpush1.msra.mxu0 0.0
    %594 = vmatprep.subr.mxu0 0.0
    %595 = vmatpush1.msra.mxu0 0.0
    %596 = vmatprep.subr.mxu0 0.0
    %597 = vmatpush1.msra.mxu0 0.0
    %598 = vmatprep.subr.mxu0 0.0
    %599 = vmatpush1.msra.mxu0 0.0
    %600 = vmatprep.subr.mxu0 0.0
    %601 = vmatpush1.msra.mxu0 0.0
    %602 = vmatprep.subr.mxu0 0.0
    %603 = vmatpush1.msra.mxu0 0.0
    %604 = vmatprep.subr.mxu0 0.0
    %605 = vmatpush1.msra.mxu0 0.0
    %606 = vmatprep.subr.mxu0 0.0
    %607 = vmatpush1.msra.mxu0 0.0
    %608 = vmatprep.subr.mxu0 0.0
    %609 = vmatpush1.msra.mxu0 0.0
    %610 = vmatprep.subr.mxu0 0.0
    %611 = vmatpush1.msra.mxu0 0.0
    %612 = vmatprep.subr.mxu0 0.0
    %613 = vmatpush1.msra.mxu0 0.0
    %614 = vmatprep.subr.mxu0 0.0
    %615 = vmatpush1.msra.mxu0 0.0
    %616 = vmatprep.subr.mxu0 0.0
    %617 = vmatpush1.msra.mxu0 0.0
    %618 = vmatprep.subr.mxu0 0.0
    %619 = vmatpush1.msra.mxu0 0.0
    %620 = vmatprep.subr.mxu0 0.0
    %621 = vmatpush1.msra.mxu0 0.0
    %622 = vmatprep.subr.mxu0 0.0
    %623 = vmatpush1.msra.mxu0 0.0
    %624 = vmatprep.subr.mxu0 0.0
    %625 = vmatpush1.msra.mxu0 0.0
    %626 = vmatprep.subr.mxu0 0.0
    %627 = vmatpush1.msra.mxu0 0.0
    %628 = vmatprep.subr.mxu0 0.0
    %629 = vmatpush1.msra.mxu0 0.0
    %630 = vmatprep.subr.mxu0 0.0
    %631 = vmatpush1.msra.mxu0 0.0
    %632 = vmatprep.subr.mxu0 0.0
    %633 = vmatpush1.msra.mxu0 0.0
    %634 = vmatprep.subr.mxu0 0.0
    %635 = vmatpush1.msra.mxu0 0.0
    %636 = vmatprep.subr.mxu0 0.0
    %637 = vmatpush1.msra.mxu0 0.0
    %638 = vmatprep.subr.mxu0 0.0
    %639 = vmatpush1.msra.mxu0 0.0
    %640 = vmatprep.subr.mxu0 0.0
    %641 = vmatpush1.msra.mxu0 0.0
    %642 = vmatprep.subr.mxu0 0.0
    %643 = vmatpush1.msra.mxu0 0.0
    %644 = vmatprep.mubr.f32.mxu0 0.0
    %645 = vmatmul.mubr.f32.gmra.mrb[0].mxu0 %v576
    %v646 = vpop.f32.mrb[0].mxu0
    %v647 = vadd.f32 0.0, %v646
    %v648 = vpop.f32.mrb[0].mxu0
    %649 = vmatprep.mubr.f32.mxu0 0.0
    %650 = vmatmul.mubr.f32.gmra.mrb[0].mxu0 %v578
    %v651 = vpop.f32.mrb[0].mxu0
    %v652 = vadd.f32 0.0, %v651
    %v653 = vpop.f32.mrb[0].mxu0
    %654 = vdwg.mxu0
    %v655 = vadd.f32 %v568, %v647
    %v656 = vadd.f32 %v569, %v652
    %v657 = vxor.u32 %v655, 2147483648
    %v658 = vxor.u32 %v656, 2147483648
    %v659 = vmul.f32 %v657, 1.442695
    %v660 = vpow.pop %v659
    %v661 = vmul.f32 %v658, 1.442695
    %v662 = vpow.pop %v661
    %v663 = vadd.f32 %v660, 1.0
    %v664 = vadd.f32 %v662, 1.0
    %v665 = vrcp.pop %v663
    %v666 = vmul.f32 1.0, %v665
    %v667 = vrcp.pop %v664
    %v668 = vmul.f32 1.0, %v667
    %v669 = vtanh.pop %v655
    %v670 = vtanh.pop %v656
    %v671 = vmul.f32 %v666, %v553
    %v672 = vmul.f32 %v668, %v554
    %675 = vrot.lane.b32.xlu0 %v669, 32
    %v676 = vpop.permute.xlu0 %675
    %677 = vrot.lane.b32.xlu0 %v670, 32
    %v678 = vpop.permute.xlu0 %677
    %v681 = vmul.f32 %v666, %v676
    %v682 = vmul.f32 %v668, %v678
    %685 = vrot.lane.b32.xlu0 %v681, 32
    %v686 = vpop.permute.xlu0 %685
    %687 = vrot.lane.b32.xlu0 %v682, 32
    %v688 = vpop.permute.xlu0 %687
    %v691 = vadd.f32 %v671, %v686
    %v692 = vadd.f32 %v672, %v688
    %v693 = vtanh.pop %v691
    %v694 = vtanh.pop %v692
    %697 = vrot.lane.b32.xlu0 %v693, 32
    %v698 = vpop.permute.xlu0 %697
    %699 = vrot.lane.b32.xlu0 %v694, 32
    %v700 = vpop.permute.xlu0 %699
    %v703 = vmul.f32 %v666, %v698
    %v704 = vmul.f32 %v668, %v700
    %s705 = scalar_lea.vmem [#allocation2], 48
    %v706 = vld [vmem:[%s705] sm:$0xff]
    %v707 = vld [vmem:[%s705 + $0x8] sm:$0xff]
    %710 = vrot.lane.b32.xlu0 %v703, 64
    %v711 = vpop.permute.xlu0 %710
    %712 = vrot.lane.b32.xlu0 %v704, 64
    %v713 = vpop.permute.xlu0 %712
    %v714 = vsel %vm300, %v711, 0
    %v716 = vsel %vm300, %v713, 0
    %718 = vmatprep.subr.mxu0 0.0
    %719 = vmatpush1.msra.mxu0 %v59
    %720 = vmatprep.subr.mxu0 0.0
    %721 = vmatpush1.msra.mxu0 %v60
    %722 = vmatprep.subr.mxu0 0.0
    %723 = vmatpush1.msra.mxu0 %v61
    %724 = vmatprep.subr.mxu0 0.0
    %725 = vmatpush1.msra.mxu0 %v62
    %726 = vmatprep.subr.mxu0 0.0
    %727 = vmatpush1.msra.mxu0 0.0
    %728 = vmatprep.subr.mxu0 0.0
    %729 = vmatpush1.msra.mxu0 0.0
    %730 = vmatprep.subr.mxu0 0.0
    %731 = vmatpush1.msra.mxu0 0.0
    %732 = vmatprep.subr.mxu0 0.0
    %733 = vmatpush1.msra.mxu0 0.0
    %734 = vmatprep.subr.mxu0 0.0
    %735 = vmatpush1.msra.mxu0 0.0
    %736 = vmatprep.subr.mxu0 0.0
    %737 = vmatpush1.msra.mxu0 0.0
    %738 = vmatprep.subr.mxu0 0.0
    %739 = vmatpush1.msra.mxu0 0.0
    %740 = vmatprep.subr.mxu0 0.0
    %741 = vmatpush1.msra.mxu0 0.0
    %742 = vmatprep.subr.mxu0 0.0
    %743 = vmatpush1.msra.mxu0 0.0
    %744 = vmatprep.subr.mxu0 0.0
    %745 = vmatpush1.msra.mxu0 0.0
    %746 = vmatprep.subr.mxu0 0.0
    %747 = vmatpush1.msra.mxu0 0.0
    %748 = vmatprep.subr.mxu0 0.0
    %749 = vmatpush1.msra.mxu0 0.0
    %750 = vmatprep.subr.mxu0 0.0
    %751 = vmatpush1.msra.mxu0 0.0
    %752 = vmatprep.subr.mxu0 0.0
    %753 = vmatpush1.msra.mxu0 0.0
    %754 = vmatprep.subr.mxu0 0.0
    %755 = vmatpush1.msra.mxu0 0.0
    %756 = vmatprep.subr.mxu0 0.0
    %757 = vmatpush1.msra.mxu0 0.0
    %758 = vmatprep.subr.mxu0 0.0
    %759 = vmatpush1.msra.mxu0 0.0
    %760 = vmatprep.subr.mxu0 0.0
    %761 = vmatpush1.msra.mxu0 0.0
    %762 = vmatprep.subr.mxu0 0.0
    %763 = vmatpush1.msra.mxu0 0.0
    %764 = vmatprep.subr.mxu0 0.0
    %765 = vmatpush1.msra.mxu0 0.0
    %766 = vmatprep.subr.mxu0 0.0
    %767 = vmatpush1.msra.mxu0 0.0
    %768 = vmatprep.subr.mxu0 0.0
    %769 = vmatpush1.msra.mxu0 0.0
    %770 = vmatprep.subr.mxu0 0.0
    %771 = vmatpush1.msra.mxu0 0.0
    %772 = vmatprep.subr.mxu0 0.0
    %773 = vmatpush1.msra.mxu0 0.0
    %774 = vmatprep.subr.mxu0 0.0
    %775 = vmatpush1.msra.mxu0 0.0
    %776 = vmatprep.subr.mxu0 0.0
    %777 = vmatpush1.msra.mxu0 0.0
    %778 = vmatprep.subr.mxu0 0.0
    %779 = vmatpush1.msra.mxu0 0.0
    %780 = vmatprep.subr.mxu0 0.0
    %781 = vmatpush1.msra.mxu0 0.0
    %782 = vmatprep.mubr.f32.mxu0 0.0
    %783 = vmatmul.mubr.f32.gmra.mrb[0].mxu0 %v714
    %v784 = vpop.f32.mrb[0].mxu0
    %v785 = vadd.f32 0.0, %v784
    %v786 = vpop.f32.mrb[0].mxu0
    %787 = vmatprep.mubr.f32.mxu0 0.0
    %788 = vmatmul.mubr.f32.gmra.mrb[0].mxu0 %v716
    %v789 = vpop.f32.mrb[0].mxu0
    %v790 = vadd.f32 0.0, %v789
    %v791 = vpop.f32.mrb[0].mxu0
    %792 = vdwg.mxu0
    %v793 = vadd.f32 %v706, %v785
    %v794 = vadd.f32 %v707, %v790
    %v795 = vxor.u32 %v793, 2147483648
    %v796 = vxor.u32 %v794, 2147483648
    %v797 = vmul.f32 %v795, 1.442695
    %v798 = vpow.pop %v797
    %v799 = vmul.f32 %v796, 1.442695
    %v800 = vpow.pop %v799
    %v801 = vadd.f32 %v798, 1.0
    %v802 = vadd.f32 %v800, 1.0
    %v803 = vrcp.pop %v801
    %v804 = vmul.f32 1.0, %v803
    %v805 = vrcp.pop %v802
    %v806 = vmul.f32 1.0, %v805
    %v807 = vtanh.pop %v793
    %v808 = vtanh.pop %v794
    %v809 = vmul.f32 %v804, %v691
    %v810 = vmul.f32 %v806, %v692
    %813 = vrot.lane.b32.xlu0 %v807, 32
    %v814 = vpop.permute.xlu0 %813
    %815 = vrot.lane.b32.xlu0 %v808, 32
    %v816 = vpop.permute.xlu0 %815
    %v819 = vmul.f32 %v804, %v814
    %v820 = vmul.f32 %v806, %v816
    %823 = vrot.lane.b32.xlu0 %v819, 32
    %v824 = vpop.permute.xlu0 %823
    %825 = vrot.lane.b32.xlu0 %v820, 32
    %v826 = vpop.permute.xlu0 %825
    %v829 = vadd.f32 %v809, %v824
    %v830 = vadd.f32 %v810, %v826
    %v831 = vtanh.pop %v829
    %v832 = vtanh.pop %v830
    %835 = vrot.lane.b32.xlu0 %v831, 32
    %v836 = vpop.permute.xlu0 %835
    %837 = vrot.lane.b32.xlu0 %v832, 32
    %v838 = vpop.permute.xlu0 %837
    %v841 = vmul.f32 %v804, %v836
    %v842 = vmul.f32 %v806, %v838
    %s843 = scalar_lea.vmem [#allocation2], 64
    %v844 = vld [vmem:[%s843] sm:$0xff]
    %v845 = vld [vmem:[%s843 + $0x8] sm:$0xff]
    %848 = vrot.lane.b32.xlu0 %v841, 64
    %v849 = vpop.permute.xlu0 %848
    %850 = vrot.lane.b32.xlu0 %v842, 64
    %v851 = vpop.permute.xlu0 %850
    %v852 = vsel %vm300, %v849, 0
    %v854 = vsel %vm300, %v851, 0
    %856 = vmatprep.subr.mxu0 0.0
    %857 = vmatpush1.msra.mxu0 %v59
    %858 = vmatprep.subr.mxu0 0.0
    %859 = vmatpush1.msra.mxu0 %v60
    %860 = vmatprep.subr.mxu0 0.0
    %861 = vmatpush1.msra.mxu0 %v61
    %862 = vmatprep.subr.mxu0 0.0
    %863 = vmatpush1.msra.mxu0 %v62
    %864 = vmatprep.subr.mxu0 0.0
    %865 = vmatpush1.msra.mxu0 0.0
    %866 = vmatprep.subr.mxu0 0.0
    %867 = vmatpush1.msra.mxu0 0.0
    %868 = vmatprep.subr.mxu0 0.0
    %869 = vmatpush1.msra.mxu0 0.0
    %870 = vmatprep.subr.mxu0 0.0
    %871 = vmatpush1.msra.mxu0 0.0
    %872 = vmatprep.subr.mxu0 0.0
    %873 = vmatpush1.msra.mxu0 0.0
    %874 = vmatprep.subr.mxu0 0.0
    %875 = vmatpush1.msra.mxu0 0.0
    %876 = vmatprep.subr.mxu0 0.0
    %877 = vmatpush1.msra.mxu0 0.0
    %878 = vmatprep.subr.mxu0 0.0
    %879 = vmatpush1.msra.mxu0 0.0
    %880 = vmatprep.subr.mxu0 0.0
    %881 = vmatpush1.msra.mxu0 0.0
    %882 = vmatprep.subr.mxu0 0.0
    %883 = vmatpush1.msra.mxu0 0.0
    %884 = vmatprep.subr.mxu0 0.0
    %885 = vmatpush1.msra.mxu0 0.0
    %886 = vmatprep.subr.mxu0 0.0
    %887 = vmatpush1.msra.mxu0 0.0
    %888 = vmatprep.subr.mxu0 0.0
    %889 = vmatpush1.msra.mxu0 0.0
    %890 = vmatprep.subr.mxu0 0.0
    %891 = vmatpush1.msra.mxu0 0.0
    %892 = vmatprep.subr.mxu0 0.0
    %893 = vmatpush1.msra.mxu0 0.0
    %894 = vmatprep.subr.mxu0 0.0
    %895 = vmatpush1.msra.mxu0 0.0
    %896 = vmatprep.subr.mxu0 0.0
    %897 = vmatpush1.msra.mxu0 0.0
    %898 = vmatprep.subr.mxu0 0.0
    %899 = vmatpush1.msra.mxu0 0.0
    %900 = vmatprep.subr.mxu0 0.0
    %901 = vmatpush1.msra.mxu0 0.0
    %902 = vmatprep.subr.mxu0 0.0
    %903 = vmatpush1.msra.mxu0 0.0
    %904 = vmatprep.subr.mxu0 0.0
    %905 = vmatpush1.msra.mxu0 0.0
    %906 = vmatprep.subr.mxu0 0.0
    %907 = vmatpush1.msra.mxu0 0.0
    %908 = vmatprep.subr.mxu0 0.0
    %909 = vmatpush1.msra.mxu0 0.0
    %910 = vmatprep.subr.mxu0 0.0
    %911 = vmatpush1.msra.mxu0 0.0
    %912 = vmatprep.subr.mxu0 0.0
    %913 = vmatpush1.msra.mxu0 0.0
    %914 = vmatprep.subr.mxu0 0.0
    %915 = vmatpush1.msra.mxu0 0.0
    %916 = vmatprep.subr.mxu0 0.0
    %917 = vmatpush1.msra.mxu0 0.0
    %918 = vmatprep.subr.mxu0 0.0
    %919 = vmatpush1.msra.mxu0 0.0
    %920 = vmatprep.mubr.f32.mxu0 0.0
    %921 = vmatmul.mubr.f32.gmra.mrb[0].mxu0 %v852
    %v922 = vpop.f32.mrb[0].mxu0
    %v923 = vadd.f32 0.0, %v922
    %v924 = vpop.f32.mrb[0].mxu0
    %925 = vmatprep.mubr.f32.mxu0 0.0
    %926 = vmatmul.mubr.f32.gmra.mrb[0].mxu0 %v854
    %v927 = vpop.f32.mrb[0].mxu0
    %v928 = vadd.f32 0.0, %v927
    %v929 = vpop.f32.mrb[0].mxu0
    %930 = vdwg.mxu0
    %v931 = vadd.f32 %v844, %v923
    %v932 = vadd.f32 %v845, %v928
    %v933 = vxor.u32 %v931, 2147483648
    %v934 = vxor.u32 %v932, 2147483648
    %v935 = vmul.f32 %v933, 1.442695
    %v936 = vpow.pop %v935
    %v937 = vmul.f32 %v934, 1.442695
    %v938 = vpow.pop %v937
    %v939 = vadd.f32 %v936, 1.0
    %v940 = vadd.f32 %v938, 1.0
    %v941 = vrcp.pop %v939
    %v942 = vmul.f32 1.0, %v941
    %v943 = vrcp.pop %v940
    %v944 = vmul.f32 1.0, %v943
    %v945 = vtanh.pop %v931
    %v946 = vtanh.pop %v932
    %v947 = vmul.f32 %v942, %v829
    %v948 = vmul.f32 %v944, %v830
    %951 = vrot.lane.b32.xlu0 %v945, 32
    %v952 = vpop.permute.xlu0 %951
    %953 = vrot.lane.b32.xlu0 %v946, 32
    %v954 = vpop.permute.xlu0 %953
    %v957 = vmul.f32 %v942, %v952
    %v958 = vmul.f32 %v944, %v954
    %961 = vrot.lane.b32.xlu0 %v957, 32
    %v962 = vpop.permute.xlu0 %961
    %963 = vrot.lane.b32.xlu0 %v958, 32
    %v964 = vpop.permute.xlu0 %963
    %v967 = vadd.f32 %v947, %v962
    %v968 = vadd.f32 %v948, %v964
    %v969 = vtanh.pop %v967
    %v970 = vtanh.pop %v968
    %973 = vrot.lane.b32.xlu0 %v969, 32
    %v974 = vpop.permute.xlu0 %973
    %975 = vrot.lane.b32.xlu0 %v970, 32
    %v976 = vpop.permute.xlu0 %975
    %v979 = vmul.f32 %v942, %v974
    %v980 = vmul.f32 %v944, %v976
    %s981 = scalar_lea.vmem [#allocation2], 80
    %v982 = vld [vmem:[%s981] sm:$0xff]
    %v983 = vld [vmem:[%s981 + $0x8] sm:$0xff]
    %986 = vrot.lane.b32.xlu0 %v979, 64
    %v987 = vpop.permute.xlu0 %986
    %988 = vrot.lane.b32.xlu0 %v980, 64
    %v989 = vpop.permute.xlu0 %988
    %v990 = vsel %vm300, %v987, 0
    %v992 = vsel %vm300, %v989, 0
    %994 = vmatprep.subr.mxu0 0.0
    %995 = vmatpush1.msra.mxu0 %v59
    %996 = vmatprep.subr.mxu0 0.0
    %997 = vmatpush1.msra.mxu0 %v60
    %998 = vmatprep.subr.mxu0 0.0
    %999 = vmatpush1.msra.mxu0 %v61
    %1000 = vmatprep.subr.mxu0 0.0
    %1001 = vmatpush1.msra.mxu0 %v62
    %1002 = vmatprep.subr.mxu0 0.0
    %1003 = vmatpush1.msra.mxu0 0.0
    %1004 = vmatprep.subr.mxu0 0.0
    %1005 = vmatpush1.msra.mxu0 0.0
    %1006 = vmatprep.subr.mxu0 0.0
    %1007 = vmatpush1.msra.mxu0 0.0
    %1008 = vmatprep.subr.mxu0 0.0
    %1009 = vmatpush1.msra.mxu0 0.0
    %1010 = vmatprep.subr.mxu0 0.0
    %1011 = vmatpush1.msra.mxu0 0.0
    %1012 = vmatprep.subr.mxu0 0.0
    %1013 = vmatpush1.msra.mxu0 0.0
    %1014 = vmatprep.subr.mxu0 0.0
    %1015 = vmatpush1.msra.mxu0 0.0
    %1016 = vmatprep.subr.mxu0 0.0
    %1017 = vmatpush1.msra.mxu0 0.0
    %1018 = vmatprep.subr.mxu0 0.0
    %1019 = vmatpush1.msra.mxu0 0.0
    %1020 = vmatprep.subr.mxu0 0.0
    %1021 = vmatpush1.msra.mxu0 0.0
    %1022 = vmatprep.subr.mxu0 0.0
    %1023 = vmatpush1.msra.mxu0 0.0
    %1024 = vmatprep.subr.mxu0 0.0
    %1025 = vmatpush1.msra.mxu0 0.0
    %1026 = vmatprep.subr.mxu0 0.0
    %1027 = vmatpush1.msra.mxu0 0.0
    %1028 = vmatprep.subr.mxu0 0.0
    %1029 = vmatpush1.msra.mxu0 0.0
    %1030 = vmatprep.subr.mxu0 0.0
    %1031 = vmatpush1.msra.mxu0 0.0
    %1032 = vmatprep.subr.mxu0 0.0
    %1033 = vmatpush1.msra.mxu0 0.0
    %1034 = vmatprep.subr.mxu0 0.0
    %1035 = vmatpush1.msra.mxu0 0.0
    %1036 = vmatprep.subr.mxu0 0.0
    %1037 = vmatpush1.msra.mxu0 0.0
    %1038 = vmatprep.subr.mxu0 0.0
    %1039 = vmatpush1.msra.mxu0 0.0
    %1040 = vmatprep.subr.mxu0 0.0
    %1041 = vmatpush1.msra.mxu0 0.0
    %1042 = vmatprep.subr.mxu0 0.0
    %1043 = vmatpush1.msra.mxu0 0.0
    %1044 = vmatprep.subr.mxu0 0.0
    %1045 = vmatpush1.msra.mxu0 0.0
    %1046 = vmatprep.subr.mxu0 0.0
    %1047 = vmatpush1.msra.mxu0 0.0
    %1048 = vmatprep.subr.mxu0 0.0
    %1049 = vmatpush1.msra.mxu0 0.0
    %1050 = vmatprep.subr.mxu0 0.0
    %1051 = vmatpush1.msra.mxu0 0.0
    %1052 = vmatprep.subr.mxu0 0.0
    %1053 = vmatpush1.msra.mxu0 0.0
    %1054 = vmatprep.subr.mxu0 0.0
    %1055 = vmatpush1.msra.mxu0 0.0
    %1056 = vmatprep.subr.mxu0 0.0
    %1057 = vmatpush1.msra.mxu0 0.0
    %1058 = vmatprep.mubr.f32.mxu0 0.0
    %1059 = vmatmul.mubr.f32.gmra.mrb[0].mxu0 %v990
    %v1060 = vpop.f32.mrb[0].mxu0
    %v1061 = vadd.f32 0.0, %v1060
    %v1062 = vpop.f32.mrb[0].mxu0
    %1063 = vmatprep.mubr.f32.mxu0 0.0
    %1064 = vmatmul.mubr.f32.gmra.mrb[0].mxu0 %v992
    %v1065 = vpop.f32.mrb[0].mxu0
    %v1066 = vadd.f32 0.0, %v1065
    %v1067 = vpop.f32.mrb[0].mxu0
    %1068 = vdwg.mxu0
    %v1069 = vadd.f32 %v982, %v1061
    %v1070 = vadd.f32 %v983, %v1066
    %v1071 = vxor.u32 %v1069, 2147483648
    %v1072 = vxor.u32 %v1070, 2147483648
    %v1073 = vmul.f32 %v1071, 1.442695
    %v1074 = vpow.pop %v1073
    %v1075 = vmul.f32 %v1072, 1.442695
    %v1076 = vpow.pop %v1075
    %v1077 = vadd.f32 %v1074, 1.0
    %v1078 = vadd.f32 %v1076, 1.0
    %v1079 = vrcp.pop %v1077
    %v1080 = vmul.f32 1.0, %v1079
    %v1081 = vrcp.pop %v1078
    %v1082 = vmul.f32 1.0, %v1081
    %v1083 = vtanh.pop %v1069
    %v1084 = vtanh.pop %v1070
    %v1085 = vmul.f32 %v1080, %v967
    %v1086 = vmul.f32 %v1082, %v968
    %1089 = vrot.lane.b32.xlu0 %v1083, 32
    %v1090 = vpop.permute.xlu0 %1089
    %1091 = vrot.lane.b32.xlu0 %v1084, 32
    %v1092 = vpop.permute.xlu0 %1091
    %v1095 = vmul.f32 %v1080, %v1090
    %v1096 = vmul.f32 %v1082, %v1092
    %1099 = vrot.lane.b32.xlu0 %v1095, 32
    %v1100 = vpop.permute.xlu0 %1099
    %1101 = vrot.lane.b32.xlu0 %v1096, 32
    %v1102 = vpop.permute.xlu0 %1101
    %v1105 = vadd.f32 %v1085, %v1100
    %v1106 = vadd.f32 %v1086, %v1102
    %v1107 = vtanh.pop %v1105
    %v1108 = vtanh.pop %v1106
    %1111 = vrot.lane.b32.xlu0 %v1107, 32
    %v1112 = vpop.permute.xlu0 %1111
    %1113 = vrot.lane.b32.xlu0 %v1108, 32
    %v1114 = vpop.permute.xlu0 %1113
    %v1117 = vmul.f32 %v1080, %v1112
    %v1118 = vmul.f32 %v1082, %v1114
    %s1119 = scalar_lea.vmem [#allocation2], 96
    %v1120 = vld [vmem:[%s1119] sm:$0xff]
    %v1121 = vld [vmem:[%s1119 + $0x8] sm:$0xff]
    %1124 = vrot.lane.b32.xlu0 %v1117, 64
    %v1125 = vpop.permute.xlu0 %1124
    %1126 = vrot.lane.b32.xlu0 %v1118, 64
    %v1127 = vpop.permute.xlu0 %1126
    %v1128 = vsel %vm300, %v1125, 0
    %v1130 = vsel %vm300, %v1127, 0
    %1132 = vmatprep.subr.mxu0 0.0
    %1133 = vmatpush1.msra.mxu0 %v59
    %1134 = vmatprep.subr.mxu0 0.0
    %1135 = vmatpush1.msra.mxu0 %v60
    %1136 = vmatprep.subr.mxu0 0.0
    %1137 = vmatpush1.msra.mxu0 %v61
    %1138 = vmatprep.subr.mxu0 0.0
    %1139 = vmatpush1.msra.mxu0 %v62
    %1140 = vmatprep.subr.mxu0 0.0
    %1141 = vmatpush1.msra.mxu0 0.0
    %1142 = vmatprep.subr.mxu0 0.0
    %1143 = vmatpush1.msra.mxu0 0.0
    %1144 = vmatprep.subr.mxu0 0.0
    %1145 = vmatpush1.msra.mxu0 0.0
    %1146 = vmatprep.subr.mxu0 0.0
    %1147 = vmatpush1.msra.mxu0 0.0
    %1148 = vmatprep.subr.mxu0 0.0
    %1149 = vmatpush1.msra.mxu0 0.0
    %1150 = vmatprep.subr.mxu0 0.0
    %1151 = vmatpush1.msra.mxu0 0.0
    %1152 = vmatprep.subr.mxu0 0.0
    %1153 = vmatpush1.msra.mxu0 0.0
    %1154 = vmatprep.subr.mxu0 0.0
    %1155 = vmatpush1.msra.mxu0 0.0
    %1156 = vmatprep.subr.mxu0 0.0
    %1157 = vmatpush1.msra.mxu0 0.0
    %1158 = vmatprep.subr.mxu0 0.0
    %1159 = vmatpush1.msra.mxu0 0.0
    %1160 = vmatprep.subr.mxu0 0.0
    %1161 = vmatpush1.msra.mxu0 0.0
    %1162 = vmatprep.subr.mxu0 0.0
    %1163 = vmatpush1.msra.mxu0 0.0
    %1164 = vmatprep.subr.mxu0 0.0
    %1165 = vmatpush1.msra.mxu0 0.0
    %1166 = vmatprep.subr.mxu0 0.0
    %1167 = vmatpush1.msra.mxu0 0.0
    %1168 = vmatprep.subr.mxu0 0.0
    %1169 = vmatpush1.msra.mxu0 0.0
    %1170 = vmatprep.subr.mxu0 0.0
    %1171 = vmatpush1.msra.mxu0 0.0
    %1172 = vmatprep.subr.mxu0 0.0
    %1173 = vmatpush1.msra.mxu0 0.0
    %1174 = vmatprep.subr.mxu0 0.0
    %1175 = vmatpush1.msra.mxu0 0.0
    %1176 = vmatprep.subr.mxu0 0.0
    %1177 = vmatpush1.msra.mxu0 0.0
    %1178 = vmatprep.subr.mxu0 0.0
    %1179 = vmatpush1.msra.mxu0 0.0
    %1180 = vmatprep.subr.mxu0 0.0
    %1181 = vmatpush1.msra.mxu0 0.0
    %1182 = vmatprep.subr.mxu0 0.0
    %1183 = vmatpush1.msra.mxu0 0.0
    %1184 = vmatprep.subr.mxu0 0.0
    %1185 = vmatpush1.msra.mxu0 0.0
    %1186 = vmatprep.subr.mxu0 0.0
    %1187 = vmatpush1.msra.mxu0 0.0
    %1188 = vmatprep.subr.mxu0 0.0
    %1189 = vmatpush1.msra.mxu0 0.0
    %1190 = vmatprep.subr.mxu0 0.0
    %1191 = vmatpush1.msra.mxu0 0.0
    %1192 = vmatprep.subr.mxu0 0.0
    %1193 = vmatpush1.msra.mxu0 0.0
    %1194 = vmatprep.subr.mxu0 0.0
    %1195 = vmatpush1.msra.mxu0 0.0
    %1196 = vmatprep.mubr.f32.mxu0 0.0
    %1197 = vmatmul.mubr.f32.gmra.mrb[0].mxu0 %v1128
    %v1198 = vpop.f32.mrb[0].mxu0
    %v1199 = vadd.f32 0.0, %v1198
    %v1200 = vpop.f32.mrb[0].mxu0
    %1201 = vmatprep.mubr.f32.mxu0 0.0
    %1202 = vmatmul.mubr.f32.gmra.mrb[0].mxu0 %v1130
    %v1203 = vpop.f32.mrb[0].mxu0
    %v1204 = vadd.f32 0.0, %v1203
    %v1205 = vpop.f32.mrb[0].mxu0
    %1206 = vdwg.mxu0
    %v1207 = vadd.f32 %v1120, %v1199
    %v1208 = vadd.f32 %v1121, %v1204
    %v1209 = vxor.u32 %v1207, 2147483648
    %v1210 = vxor.u32 %v1208, 2147483648
    %v1211 = vmul.f32 %v1209, 1.442695
    %v1212 = vpow.pop %v1211
    %v1213 = vmul.f32 %v1210, 1.442695
    %v1214 = vpow.pop %v1213
    %v1215 = vadd.f32 %v1212, 1.0
    %v1216 = vadd.f32 %v1214, 1.0
    %v1217 = vrcp.pop %v1215
    %v1218 = vmul.f32 1.0, %v1217
    %v1219 = vrcp.pop %v1216
    %v1220 = vmul.f32 1.0, %v1219
    %v1221 = vtanh.pop %v1207
    %v1222 = vtanh.pop %v1208
    %v1223 = vmul.f32 %v1218, %v1105
    %v1224 = vmul.f32 %v1220, %v1106
    %1227 = vrot.lane.b32.xlu0 %v1221, 32
    %v1228 = vpop.permute.xlu0 %1227
    %1229 = vrot.lane.b32.xlu0 %v1222, 32
    %v1230 = vpop.permute.xlu0 %1229
    %v1233 = vmul.f32 %v1218, %v1228
    %v1234 = vmul.f32 %v1220, %v1230
    %1237 = vrot.lane.b32.xlu0 %v1233, 32
    %v1238 = vpop.permute.xlu0 %1237
    %1239 = vrot.lane.b32.xlu0 %v1234, 32
    %v1240 = vpop.permute.xlu0 %1239
    %v1243 = vadd.f32 %v1223, %v1238
    %v1244 = vadd.f32 %v1224, %v1240
    %v1245 = vtanh.pop %v1243
    %v1246 = vtanh.pop %v1244
    %1249 = vrot.lane.b32.xlu0 %v1245, 32
    %v1250 = vpop.permute.xlu0 %1249
    %1251 = vrot.lane.b32.xlu0 %v1246, 32
    %v1252 = vpop.permute.xlu0 %1251
    %v1255 = vmul.f32 %v1218, %v1250
    %v1256 = vmul.f32 %v1220, %v1252
    %s1257 = scalar_lea.vmem [#allocation2], 112
    %v1258 = vld [vmem:[%s1257] sm:$0xff]
    %v1259 = vld [vmem:[%s1257 + $0x8] sm:$0xff]
    %1262 = vrot.lane.b32.xlu0 %v1255, 64
    %v1263 = vpop.permute.xlu0 %1262
    %1264 = vrot.lane.b32.xlu0 %v1256, 64
    %v1265 = vpop.permute.xlu0 %1264
    %v1266 = vsel %vm300, %v1263, 0
    %v1268 = vsel %vm300, %v1265, 0
    %1270 = vmatprep.subr.mxu0 0.0
    %1271 = vmatpush1.msra.mxu0 %v59
    %1272 = vmatprep.subr.mxu0 0.0
    %1273 = vmatpush1.msra.mxu0 %v60
    %1274 = vmatprep.subr.mxu0 0.0
    %1275 = vmatpush1.msra.mxu0 %v61
    %1276 = vmatprep.subr.mxu0 0.0
    %1277 = vmatpush1.msra.mxu0 %v62
    %1278 = vmatprep.subr.mxu0 0.0
    %1279 = vmatpush1.msra.mxu0 0.0
    %1280 = vmatprep.subr.mxu0 0.0
    %1281 = vmatpush1.msra.mxu0 0.0
    %1282 = vmatprep.subr.mxu0 0.0
    %1283 = vmatpush1.msra.mxu0 0.0
    %1284 = vmatprep.subr.mxu0 0.0
    %1285 = vmatpush1.msra.mxu0 0.0
    %1286 = vmatprep.subr.mxu0 0.0
    %1287 = vmatpush1.msra.mxu0 0.0
    %1288 = vmatprep.subr.mxu0 0.0
    %1289 = vmatpush1.msra.mxu0 0.0
    %1290 = vmatprep.subr.mxu0 0.0
    %1291 = vmatpush1.msra.mxu0 0.0
    %1292 = vmatprep.subr.mxu0 0.0
    %1293 = vmatpush1.msra.mxu0 0.0
    %1294 = vmatprep.subr.mxu0 0.0
    %1295 = vmatpush1.msra.mxu0 0.0
    %1296 = vmatprep.subr.mxu0 0.0
    %1297 = vmatpush1.msra.mxu0 0.0
    %1298 = vmatprep.subr.mxu0 0.0
    %1299 = vmatpush1.msra.mxu0 0.0
    %1300 = vmatprep.subr.mxu0 0.0
    %1301 = vmatpush1.msra.mxu0 0.0
    %1302 = vmatprep.subr.mxu0 0.0
    %1303 = vmatpush1.msra.mxu0 0.0
    %1304 = vmatprep.subr.mxu0 0.0
    %1305 = vmatpush1.msra.mxu0 0.0
    %1306 = vmatprep.subr.mxu0 0.0
    %1307 = vmatpush1.msra.mxu0 0.0
    %1308 = vmatprep.subr.mxu0 0.0
    %1309 = vmatpush1.msra.mxu0 0.0
    %1310 = vmatprep.subr.mxu0 0.0
    %1311 = vmatpush1.msra.mxu0 0.0
    %1312 = vmatprep.subr.mxu0 0.0
    %1313 = vmatpush1.msra.mxu0 0.0
    %1314 = vmatprep.subr.mxu0 0.0
    %1315 = vmatpush1.msra.mxu0 0.0
    %1316 = vmatprep.subr.mxu0 0.0
    %1317 = vmatpush1.msra.mxu0 0.0
    %1318 = vmatprep.subr.mxu0 0.0
    %1319 = vmatpush1.msra.mxu0 0.0
    %1320 = vmatprep.subr.mxu0 0.0
    %1321 = vmatpush1.msra.mxu0 0.0
    %1322 = vmatprep.subr.mxu0 0.0
    %1323 = vmatpush1.msra.mxu0 0.0
    %1324 = vmatprep.subr.mxu0 0.0
    %1325 = vmatpush1.msra.mxu0 0.0
    %1326 = vmatprep.subr.mxu0 0.0
    %1327 = vmatpush1.msra.mxu0 0.0
    %1328 = vmatprep.subr.mxu0 0.0
    %1329 = vmatpush1.msra.mxu0 0.0
    %1330 = vmatprep.subr.mxu0 0.0
    %1331 = vmatpush1.msra.mxu0 0.0
    %1332 = vmatprep.subr.mxu0 0.0
    %1333 = vmatpush1.msra.mxu0 0.0
    %1334 = vmatprep.mubr.f32.mxu0 0.0
    %1335 = vmatmul.mubr.f32.gmra.mrb[0].mxu0 %v1266
    %v1336 = vpop.f32.mrb[0].mxu0
    %v1337 = vadd.f32 0.0, %v1336
    %v1338 = vpop.f32.mrb[0].mxu0
    %1339 = vmatprep.mubr.f32.mxu0 0.0
    %1340 = vmatmul.mubr.f32.gmra.mrb[0].mxu0 %v1268
    %v1341 = vpop.f32.mrb[0].mxu0
    %v1342 = vadd.f32 0.0, %v1341
    %v1343 = vpop.f32.mrb[0].mxu0
    %1344 = vdwg.mxu0
    %v1345 = vadd.f32 %v1258, %v1337
    %v1346 = vadd.f32 %v1259, %v1342
    %v1347 = vxor.u32 %v1345, 2147483648
    %v1348 = vxor.u32 %v1346, 2147483648
    %v1349 = vmul.f32 %v1347, 1.442695
    %v1350 = vpow.pop %v1349
    %v1351 = vmul.f32 %v1348, 1.442695
    %v1352 = vpow.pop %v1351
    %v1353 = vadd.f32 %v1350, 1.0
    %v1354 = vadd.f32 %v1352, 1.0
    %v1355 = vrcp.pop %v1353
    %v1356 = vmul.f32 1.0, %v1355
    %v1357 = vrcp.pop %v1354
    %v1358 = vmul.f32 1.0, %v1357
    %v1359 = vtanh.pop %v1345
    %v1360 = vtanh.pop %v1346
    %v1361 = vmul.f32 %v1356, %v1243
    %v1362 = vmul.f32 %v1358, %v1244
    %1365 = vrot.lane.b32.xlu0 %v1359, 32
    %v1366 = vpop.permute.xlu0 %1365
    %1367 = vrot.lane.b32.xlu0 %v1360, 32
    %v1368 = vpop.permute.xlu0 %1367
    %v1371 = vmul.f32 %v1356, %v1366
    %v1372 = vmul.f32 %v1358, %v1368
    %1375 = vrot.lane.b32.xlu0 %v1371, 32
    %v1376 = vpop.permute.xlu0 %1375
    %1377 = vrot.lane.b32.xlu0 %v1372, 32
    %v1378 = vpop.permute.xlu0 %1377
    %v1381 = vadd.f32 %v1361, %v1376
    %v1382 = vadd.f32 %v1362, %v1378
    %v1383 = vtanh.pop %v1381
    %v1384 = vtanh.pop %v1382
    %1387 = vrot.lane.b32.xlu0 %v1383, 32
    %v1388 = vpop.permute.xlu0 %1387
    %1389 = vrot.lane.b32.xlu0 %v1384, 32
    %v1390 = vpop.permute.xlu0 %1389
    %v1393 = vmul.f32 %v1356, %v1388
    %v1394 = vmul.f32 %v1358, %v1390
    %vm1395 = vcmask 785920
    %v1396 = vsel %vm1395, %v1393, 0.0
    %v1397 = vrot.slane %v1396, 4
    %v1398 = vadd.f32 %v1396, %v1397
    %v1399 = vrot.slane %v1398, 2
    %v1400 = vadd.f32 %v1398, %v1399
    %v1401 = vrot.slane %v1400, 1
    %v1402 = vadd.f32 %v1400, %v1401
    %v1403 = vrcp.pop 8.0
    %v1404 = vmul.f32 %v1402, %v1403
    %v1405 = vsub.f32 %v1393, %v1404
    %v1406 = vmul.f32 %v1405, %v1405
    %v1407 = vsel %vm1395, %v1406, 0.0
    %v1408 = vrot.slane %v1407, 4
    %v1409 = vadd.f32 %v1407, %v1408
    %v1410 = vrot.slane %v1409, 2
    %v1411 = vadd.f32 %v1409, %v1410
    %v1412 = vrot.slane %v1411, 1
    %v1413 = vadd.f32 %v1411, %v1412
    %v1414 = vrcp.pop 7.0
    %v1415 = vmul.f32 %v1413, %v1414
    %v1416 = vrsqrt.pop %v1415
    %v1417 = vmul.f32 %v1415, %v1416
    %vm1418 = vcmp.eq.f32.partialorder %v1415, inf
    %v1419 = vsel %vm1418, %v1415, %v1417
    %vm1420 = vcmp.eq.f32.partialorder %v1415, 0.0
    %v1421 = vand.u32 %v1415, 2147483648
    %v1422 = vsel %vm1420, %v1421, %v1419
    %v1423 = vadd.f32 %v1422, 0.001
    %v1424 = vrcp.pop %v1423
    %v1425 = vmul.f32 %v1405, %v1424
    %v1426 = vsel %vm1395, %v1394, 0.0
    %v1427 = vrot.slane %v1426, 4
    %v1428 = vadd.f32 %v1426, %v1427
    %v1429 = vrot.slane %v1428, 2
    %v1430 = vadd.f32 %v1428, %v1429
    %v1431 = vrot.slane %v1430, 1
    %v1432 = vadd.f32 %v1430, %v1431
    %v1433 = vmul.f32 %v1432, %v1403
    %v1434 = vsub.f32 %v1394, %v1433
    %v1435 = vmul.f32 %v1434, %v1434
    %v1436 = vsel %vm1395, %v1435, 0.0
    %v1437 = vrot.slane %v1436, 4
    %v1438 = vadd.f32 %v1436, %v1437
    %v1439 = vrot.slane %v1438, 2
    %v1440 = vadd.f32 %v1438, %v1439
    %v1441 = vrot.slane %v1440, 1
    %v1442 = vadd.f32 %v1440, %v1441
    %v1443 = vmul.f32 %v1442, %v1414
    %v1444 = vrsqrt.pop %v1443
    %v1445 = vmul.f32 %v1443, %v1444
    %vm1446 = vcmp.eq.f32.partialorder %v1443, inf
    %v1447 = vsel %vm1446, %v1443, %v1445
    %vm1448 = vcmp.eq.f32.partialorder %v1443, 0.0
    %v1449 = vand.u32 %v1443, 2147483648
    %v1450 = vsel %vm1448, %v1449, %v1447
    %v1451 = vadd.f32 %v1450, 0.001
    %v1452 = vrcp.pop %v1451
    %v1453 = vmul.f32 %v1434, %v1452
    %1455 = vrot.lane.b32.xlu0 %v1425, 64
    %v1456 = vpop.permute.xlu0 %1455
    %1458 = vxpose.xlu0.b32.start [1/16] %v1456, 128
    %1459 = vxpose.xlu0.b32.cont [2/16] 0.0, 128
    %1460 = vxpose.xlu0.b32.cont [3/16] 0.0, 128
    %1461 = vxpose.xlu0.b32.cont [4/16] 0.0, 128
    %1462 = vxpose.xlu0.b32.cont [5/16] 0.0, 128
    %1463 = vxpose.xlu0.b32.cont [6/16] 0.0, 128
    %1464 = vxpose.xlu0.b32.cont [7/16] 0.0, 128
    %1465 = vxpose.xlu0.b32.cont [8/16] 0.0, 128
    %1466 = vxpose.xlu0.b32.cont [9/16] 0.0, 128
    %1467 = vxpose.xlu0.b32.cont [10/16] 0.0, 128
    %1468 = vxpose.xlu0.b32.cont [11/16] 0.0, 128
    %1469 = vxpose.xlu0.b32.cont [12/16] 0.0, 128
    %1470 = vxpose.xlu0.b32.cont [13/16] 0.0, 128
    %1471 = vxpose.xlu0.b32.cont [14/16] 0.0, 128
    %1472 = vxpose.xlu0.b32.cont [15/16] 0.0, 128
    %1473 = vxpose.xlu0.b32.end [16/16] 0.0, 128
    %v1474 = vpop.trf.xlu0
    %v1475 = vpop.trf.xlu0
    %v1476 = vpop.trf.xlu0
    %v1477 = vpop.trf.xlu0
    %v1478 = vpop.trf.xlu0
    %v1479 = vpop.trf.xlu0
    %v1480 = vpop.trf.xlu0
    %v1481 = vpop.trf.xlu0
    %v1482 = vpop.trf.xlu0
    %v1483 = vpop.trf.xlu0
    %v1484 = vpop.trf.xlu0
    %v1485 = vpop.trf.xlu0
    %v1486 = vpop.trf.xlu0
    %v1487 = vpop.trf.xlu0
    %v1488 = vpop.trf.xlu0
    %v1489 = vpop.trf.xlu0
    %1491 = vrot.lane.b32.xlu0 %v1453, 64
    %v1492 = vpop.permute.xlu0 %1491
    %vm1494 = vcmask 64512
    %v1496 = vsel %vm1494, %v1474, 0
    %v1499 = vsel %vm1494, %v1475, 0
    %v1502 = vsel %vm1494, %v1476, 0
    %v1505 = vsel %vm1494, %v1477, 0
    %1507 = vmatprep.subr.mxu0 0.0
    %1508 = vmatpush1.msra.mxu0 %v1492
    %1509 = vmatprep.subr.mxu0 0.0
    %1510 = vmatpush1.msra.mxu0 0.0
    %1511 = vmatprep.subr.mxu0 0.0
    %1512 = vmatpush1.msra.mxu0 0.0
    %1513 = vmatprep.subr.mxu0 0.0
    %1514 = vmatpush1.msra.mxu0 0.0
    %1515 = vmatprep.subr.mxu0 0.0
    %1516 = vmatpush1.msra.mxu0 0.0
    %1517 = vmatprep.subr.mxu0 0.0
    %1518 = vmatpush1.msra.mxu0 0.0
    %1519 = vmatprep.subr.mxu0 0.0
    %1520 = vmatpush1.msra.mxu0 0.0
    %1521 = vmatprep.subr.mxu0 0.0
    %1522 = vmatpush1.msra.mxu0 0.0
    %1523 = vmatprep.subr.mxu0 0.0
    %1524 = vmatpush1.msra.mxu0 0.0
    %1525 = vmatprep.subr.mxu0 0.0
    %1526 = vmatpush1.msra.mxu0 0.0
    %1527 = vmatprep.subr.mxu0 0.0
    %1528 = vmatpush1.msra.mxu0 0.0
    %1529 = vmatprep.subr.mxu0 0.0
    %1530 = vmatpush1.msra.mxu0 0.0
    %1531 = vmatprep.subr.mxu0 0.0
    %1532 = vmatpush1.msra.mxu0 0.0
    %1533 = vmatprep.subr.mxu0 0.0
    %1534 = vmatpush1.msra.mxu0 0.0
    %1535 = vmatprep.subr.mxu0 0.0
    %1536 = vmatpush1.msra.mxu0 0.0
    %1537 = vmatprep.subr.mxu0 0.0
    %1538 = vmatpush1.msra.mxu0 0.0
    %1539 = vmatprep.subr.mxu0 0.0
    %1540 = vmatpush1.msra.mxu0 0.0
    %1541 = vmatprep.subr.mxu0 0.0
    %1542 = vmatpush1.msra.mxu0 0.0
    %1543 = vmatprep.subr.mxu0 0.0
    %1544 = vmatpush1.msra.mxu0 0.0
    %1545 = vmatprep.subr.mxu0 0.0
    %1546 = vmatpush1.msra.mxu0 0.0
    %1547 = vmatprep.subr.mxu0 0.0
    %1548 = vmatpush1.msra.mxu0 0.0
    %1549 = vmatprep.subr.mxu0 0.0
    %1550 = vmatpush1.msra.mxu0 0.0
    %1551 = vmatprep.subr.mxu0 0.0
    %1552 = vmatpush1.msra.mxu0 0.0
    %1553 = vmatprep.subr.mxu0 0.0
    %1554 = vmatpush1.msra.mxu0 0.0
    %1555 = vmatprep.subr.mxu0 0.0
    %1556 = vmatpush1.msra.mxu0 0.0
    %1557 = vmatprep.subr.mxu0 0.0
    %1558 = vmatpush1.msra.mxu0 0.0
    %1559 = vmatprep.subr.mxu0 0.0
    %1560 = vmatpush1.msra.mxu0 0.0
    %1561 = vmatprep.subr.mxu0 0.0
    %1562 = vmatpush1.msra.mxu0 0.0
    %1563 = vmatprep.subr.mxu0 0.0
    %1564 = vmatpush1.msra.mxu0 0.0
    %1565 = vmatprep.subr.mxu0 0.0
    %1566 = vmatpush1.msra.mxu0 0.0
    %1567 = vmatprep.subr.mxu0 0.0
    %1568 = vmatpush1.msra.mxu0 0.0
    %1569 = vmatprep.subr.mxu0 0.0
    %1570 = vmatpush1.msra.mxu0 0.0
    %1571 = vmatprep.mubr.f32.mxu0 0.0
    %1572 = vmatmul.mubr.f32.gmra.mrb[0].mxu0 %v1496
    %v1573 = vpop.f32.mrb[0].mxu0
    %v1574 = vadd.f32 0.0, %v1573
    %v1575 = vpop.f32.mrb[0].mxu0
    %1576 = vmatprep.mubr.f32.mxu0 0.0
    %1577 = vmatmul.mubr.f32.gmra.mrb[0].mxu0 %v1499
    %v1578 = vpop.f32.mrb[0].mxu0
    %v1579 = vadd.f32 0.0, %v1578
    %v1580 = vpop.f32.mrb[0].mxu0
    %1581 = vmatprep.mubr.f32.mxu0 0.0
    %1582 = vmatmul.mubr.f32.gmra.mrb[0].mxu0 %v1502
    %v1583 = vpop.f32.mrb[0].mxu0
    %v1584 = vadd.f32 0.0, %v1583
    %v1585 = vpop.f32.mrb[0].mxu0
    %1586 = vmatprep.mubr.f32.mxu0 0.0
    %1587 = vmatmul.mubr.f32.gmra.mrb[0].mxu0 %v1505
    %v1588 = vpop.f32.mrb[0].mxu0
    %v1589 = vadd.f32 0.0, %v1588
    %v1590 = vpop.f32.mrb[0].mxu0
    %1591 = vdwg.mxu0
    %v1592 = vmul.f32 %v1574, %v1403
    %v1593 = vmul.f32 %v1579, %v1403
    %v1594 = vmul.f32 %v1584, %v1403
    %v1595 = vmul.f32 %v1589, %v1403
    %v1596 = vlaneseq
    %v1597 = vshrl.u32 %v1596, 7
    %v1598 = vadd.s32 %v1597, 8
    %v1599 = vadd.s32 %v1597, 16
    %v1600 = vadd.s32 %v1597, 24
    %v1601 = vlaneseq
    %v1602 = vand.u32 %v1601, 127
    %vm1603 = vcmp.eq.s32.totalorder %v1597, %v1602
    %vm1604 = vcmp.eq.s32.totalorder %v1598, %v1602
    %vm1605 = vcmp.eq.s32.totalorder %v1599, %v1602
    %vm1606 = vcmp.eq.s32.totalorder %v1600, %v1602
    %v1607 = vsel %vm1603, 1, 0
    %v1608 = vsel %vm1604, 1, 0
    %v1609 = vsel %vm1605, 1, 0
    %v1610 = vsel %vm1606, 1, 0
    %v1611 = vcvt.s32.f32 %v1607
    %v1612 = vcvt.s32.f32 %v1608
    %v1613 = vcvt.s32.f32 %v1609
    %v1614 = vcvt.s32.f32 %v1610
    %v1615 = vsub.f32 %v1592, %v1611
    %v1616 = vsub.f32 %v1593, %v1612
    %v1617 = vsub.f32 %v1594, %v1613
    %v1618 = vsub.f32 %v1595, %v1614
    %v1619 = vmul.f32 %v1615, %v1615
    %v1620 = vmul.f32 %v1616, %v1616
    %v1621 = vmul.f32 %v1617, %v1617
    %v1622 = vmul.f32 %v1618, %v1618
    %v1623 = vsel %vm300, %v1619, 0.0
    %v1624 = vsel %vm300, %v1620, 0.0
    %v1625 = vadd.f32 %v1623, %v1624
    %v1626 = vsel %vm300, %v1621, 0.0
    %v1627 = vadd.f32 %v1625, %v1626
    %v1628 = vsel %vm300, %v1622, 0.0
    %v1629 = vadd.f32 %v1627, %v1628
    %1630 = vadd.xlane.f32.xlu0 %v1629
    %v1631 = vpop.xlane.xlu0 %1630
    %v1632 = vrot.slane %v1631, 4
    %v1633 = vadd.f32 %v1631, %v1632
    %v1634 = vrot.slane %v1633, 2
    %v1635 = vadd.f32 %v1633, %v1634
    %v1636 = vrot.slane %v1635, 1
    %v1637 = vadd.f32 %v1635, %v1636
    %s1638 = vtos %v1637
    %s1639 = smul.f32 %s1638, 0.002
    %v1640 = vmul.f32 %v1611, %v1619
    %v1641 = vmul.f32 %v1612, %v1620
    %v1642 = vmul.f32 %v1613, %v1621
    %v1643 = vmul.f32 %v1614, %v1622
    %v1644 = vsel %vm300, %v1640, 0.0
    %v1645 = vsel %vm300, %v1641, 0.0
    %v1646 = vadd.f32 %v1644, %v1645
    %v1647 = vsel %vm300, %v1642, 0.0
    %v1648 = vadd.f32 %v1646, %v1647
    %v1649 = vsel %vm300, %v1643, 0.0
    %v1650 = vadd.f32 %v1648, %v1649
    %1651 = vadd.xlane.f32.xlu0 %v1650
    %v1652 = vpop.xlane.xlu0 %1651
    %v1653 = vrot.slane %v1652, 4
    %v1654 = vadd.f32 %v1652, %v1653
    %v1655 = vrot.slane %v1654, 2
    %v1656 = vadd.f32 %v1654, %v1655
    %v1657 = vrot.slane %v1656, 1
    %v1658 = vadd.f32 %v1656, %v1657
    %s1659 = vtos %v1658
    %s1660 = smul.f32 %s1659, 0.998
    %s1661 = sadd.f32 %s1639, %s1660
    %s1662 = scalar_lea.smem [#allocation9], 0
    %1663 = sst [smem:[%s1662]] %s1661
    // Predicated region
    $region30: #{tpu_custom_call.1} parent=1 // pred_check
      _
    $region31: #{tpu_custom_call.1} parent=1 // pred_check_branch
      %1665 = sbr.rel (0) target = $region33
    $region32: #{tpu_custom_call.1} parent=1 // pred_region
      %s1667 = ssub.s32 16, 16
      %1668 = vsyncadd [#allocation5], %s1667
      %1671 = dma.smem_to_hbm [#allocation9], 16, %s4, [#allocation5]
    $region33: #{tpu_custom_call.1} parent=1 // pred_fallthru
      _
    // Predicated region
    $region34: #{tpu_custom_call.1} parent=1 // pred_check
      _
    $region35: #{tpu_custom_call.1} parent=1 // pred_check_branch
      %1673 = sbr.rel (0) target = $region37
    $region36: #{tpu_custom_call.1} parent=1 // pred_region
      %1674 = dma.done [#allocation5], 16
    $region37: #{tpu_custom_call.1} parent=1 // pred_fallthru
      _
    %1675 = sfence
    %1676 = vsyncpa [#allocation4], 1
    %1677 = vsyncpa [#allocation7], 1
    %1678 = vsyncpa [#allocation5], 1

</llo_original>
